<compile_context>
chip_gen: v5e
topology: v5e:2x2
jax: 0.10.0
libtpu: 0.0.40
codegen_flags: <defaults>
</compile_context>

<pallas_src>
import functools

import numpy as np
import jax
import jax.numpy as jnp
from jax import lax
from jax.experimental import pallas as pl
from jax.experimental.pallas import tpu as pltpu


# ----------------------------------------------------------------------------
# host-side constants (cached per shape, built once)
# ----------------------------------------------------------------------------
def _bilinear_matrix(out_size: int, in_size: int) -> np.ndarray:
    """1-D interpolation matrix matching F.interpolate(mode='bilinear',
    align_corners=False) along one axis."""
    L = np.zeros((out_size, in_size), dtype=np.float32)
    scale = in_size / out_size
    for o in range(out_size):
        src = max((o + 0.5) * scale - 0.5, 0.0)
        i0 = min(int(np.floor(src)), in_size - 1)
        i1 = min(i0 + 1, in_size - 1)
        lam = src - i0
        L[o, i0] += 1.0 - lam
        L[o, i1] += lam
    return L


@functools.lru_cache(maxsize=None)
def _spatial_constants(H: int, W: int):
    """KT: (64, H*W) transposed kron(Ly, Lx) upsample operator.
       masks: (9, H*W) zero-padding validity masks for the 3x3 taps."""
    Ly = _bilinear_matrix(H, 8)
    Lx = _bilinear_matrix(W, 8)
    KT = np.kron(Ly, Lx).T.astype(np.float32)                      # (64, HW)
    ys, xs = np.meshgrid(np.arange(H), np.arange(W), indexing="ij")
    masks = np.zeros((9, H * W), np.float32)
    for t in range(9):
        dy, dx = t // 3 - 1, t % 3 - 1
        valid = (ys + dy >= 0) & (ys + dy < H) & (xs + dx >= 0) & (xs + dx < W)
        masks[t] = valid.reshape(-1).astype(np.float32)
    return jnp.asarray(KT), jnp.asarray(masks)


@functools.lru_cache(maxsize=None)
def _group_matrix(C: int, HW: int):
    """A[c, c'] = 1/(HW * C/8) if c, c' belong to the same GroupNorm group."""
    G = np.repeat(np.eye(8, dtype=np.float32), C // 8, axis=0)     # (C, 8)
    A = (G @ G.T) / float(HW * (C // 8))                           # (C, C)
    return jnp.asarray(A)


# ----------------------------------------------------------------------------
# Pallas kernel: upsample + conv1(+gate row) + GroupNorm + ReLU + conv2 + residual
# ----------------------------------------------------------------------------
def _inject_kernel(W, img_ref, msg_ref, kt_ref, mask_ref,
                   w1_ref, w2_ref, vec_ref, a_ref,
                   out_ref, x9_ref):
    img = img_ref[0]                               # (C, HW)  lane-dense
    C, HW = img.shape
    masks = mask_ref[...]                          # (9, HW)
    vecs = vec_ref[...]                            # (C+1, 4) packed per-channel vectors
    b1e = vecs[:, 0:1]                             # conv1 bias | gate bias  (C+1, 1)
    gamma = vecs[0:C, 1:2]
    beta = vecs[0:C, 2:3]
    b2 = vecs[0:C, 3:4]

    # bilinear 8x8 -> HxW upsample of the expanded message (one small matmul)
    up = jnp.dot(msg_ref[0], kt_ref[...],
                 preferred_element_type=jnp.float32)               # (C, HW)

    # im2col over the 9 taps of a zero-padded 3x3 conv: shift along the
    # flattened spatial (lane) axis with pltpu.roll (XLU) and apply the
    # precomputed boundary mask, writing taps STRAIGHT into the VMEM scratch
    # at their packed row offsets (no jnp.concatenate materialization).
    for t in range(9):
        dy, dx = t // 3 - 1, t % 3 - 1
        off = dy * W + dx
        if off == 0:                               # center tap: no roll, mask all-ones
            img_t, up_t = img, up
        else:
            m = masks[t:t + 1, :]
            img_t = pltpu.roll(img, (-off) % HW, axis=1) * m
            up_t = pltpu.roll(up, (-off) % HW, axis=1) * m
        x9_ref[t * 2 * C:t * 2 * C + C, :] = img_t
        x9_ref[t * 2 * C + C:(t + 1) * 2 * C, :] = up_t

    # conv1 (3x3, pad=1) on [img, up] with the gate row folded in:
    # single MXU matmul, K = 9*2C, M = C+1.  Row C is the 1x1 gate logit.
    acc = jnp.dot(w1_ref[...], x9_ref[...],
                  preferred_element_type=jnp.float32) + b1e        # (C+1, HW)
    accC = acc[0:C]                                                # conv1 result
    gate = jax.nn.sigmoid(acc[C:C + 1])                            # (1, HW)

    # GroupNorm(8, C): lane reductions first (XLU), then ONE tiny group-average
    # matmul on the stacked (C, 2) stats.  var = E[x^2] - E[x]^2 in f32.
    s = jnp.sum(accC, axis=-1, keepdims=True)                      # (C, 1)
    sq = jnp.sum(accC * accC, axis=-1, keepdims=True)              # (C, 1)
    gstats = jnp.dot(a_ref[...], jnp.concatenate([s, sq], axis=1),
                     preferred_element_type=jnp.float32)           # (C, 2)
    mean = gstats[:, 0:1]
    msq = gstats[:, 1:2]
    rstd = lax.rsqrt(msq - mean * mean + 1e-5)
    act = jnp.maximum((accC - mean) * rstd * gamma + beta, 0.0)    # (C, HW)

    # conv2 (3x3, pad=1): im2col of act reuses the first 9*C rows of the scratch
    for t in range(9):
        dy, dx = t // 3 - 1, t % 3 - 1
        off = dy * W + dx
        if off == 0:
            a_t = act
        else:
            a_t = pltpu.roll(act, (-off) % HW, axis=1) * masks[t:t + 1, :]
        x9_ref[t * C:(t + 1) * C, :] = a_t

    mod = jnp.dot(w2_ref[...], x9_ref[0:9 * C, :],
                  preferred_element_type=jnp.float32) + b2         # (C, HW)

    # residual injection with the folded gate
    out_ref[0] = (img + gate * mod).astype(out_ref.dtype)


# ----------------------------------------------------------------------------
# jitted wrapper
# ----------------------------------------------------------------------------
@functools.partial(jax.jit, static_argnames=("H", "W"))
def _forward(image_nchw, message, params, KT, masks, A, *, H, W):
    B, C = image_nchw.shape[0], image_nchw.shape[1]
    HW = H * W

    # spatial_expand: Linear -> ReLU -> Linear.  Tiny matmuls, left to XLA;
    # default matmul precision (review: drop Precision.HIGHEST).
    h = jnp.maximum(jnp.dot(message, params["lin1_w"]) + params["lin1_b"], 0.0)
    m2 = jnp.dot(h, params["lin2_w"]) + params["lin2_b"]          # (B, C*64)
    msg64 = m2.reshape(B, C, 64)        # torch .view(B, C, 8, 8), flattened

    # channels-first, spatial-flattened layout: NCHW -> (B, C, H*W), no transpose
    img = image_nchw.reshape(B, C, HW)

    # pack conv1 weights for the im2col matmul: Wp[co, t*2C + ci] = w[t, ci, co];
    # append the 1x1 gate conv as an extra output row on the center-tap
    # image-channel columns (review: fold gate into conv1).
    w1p = jnp.transpose(params["conv1_w"], (2, 0, 1)).reshape(C, 9 * 2 * C)
    gate_row = jnp.zeros((1, 9 * 2 * C), jnp.float32)
    gate_row = gate_row.at[0, 4 * 2 * C:4 * 2 * C + C].set(params["gate_w"].reshape(C))
    w1e = jnp.concatenate([w1p, gate_row], axis=0)                 # (C+1, 18C)
    w2p = jnp.transpose(params["conv2_w"], (2, 0, 1)).reshape(C, 9 * C)

    # pack all per-channel vectors into one (C+1, 4) array (review: fewer inputs)
    zpad = jnp.zeros((1, 1), jnp.float32)
    b1e = jnp.concatenate([params["conv1_b"].reshape(C, 1),
                           params["gate_b"].reshape(1, 1)], axis=0)
    gam = jnp.concatenate([params["gn_gamma"].reshape(C, 1), zpad], axis=0)
    bet = jnp.concatenate([params["gn_beta"].reshape(C, 1), zpad], axis=0)
    b2 = jnp.concatenate([params["conv2_b"].reshape(C, 1), zpad], axis=0)
    vecs = jnp.concatenate([b1e, gam, bet, b2], axis=1)            # (C+1, 4)

    def full(a):                                   # whole-array constant block
        return pl.BlockSpec(a.shape, lambda b, _nd=a.ndim: (0,) * _nd)

    out = pl.pallas_call(
        functools.partial(_inject_kernel, W),
        out_shape=jax.ShapeDtypeStruct((B, C, HW), jnp.float32),
        grid=(B,),
        in_specs=[
            pl.BlockSpec((1, C, HW), lambda b: (b, 0, 0)),   # image features
            pl.BlockSpec((1, C, 64), lambda b: (b, 0, 0)),   # expanded message
            full(KT), full(masks), full(w1e), full(w2p), full(vecs), full(A),
        ],
        out_specs=pl.BlockSpec((1, C, HW), lambda b: (b, 0, 0)),
        scratch_shapes=[pltpu.VMEM((9 * 2 * C, HW), jnp.float32)],  # im2col buffer
        compiler_params=pltpu.CompilerParams(
            dimension_semantics=("parallel",),               # megacore on v7x
            vmem_limit_bytes=16 * 1024 * 1024,
        ),
    )(img, msg64, KT, masks, w1e, w2p, vecs, A)

    return out.reshape(B, C, H, W)                 # NCHW, no transpose needed


def message_injector(image_nchw, message, params):
    B, C, H, W = image_nchw.shape
    KT, masks = _spatial_constants(H, W)
    A = _group_matrix(C, H * W)
    return _forward(image_nchw, message, params, KT, masks, A, H=H, W=W)


# ----------------------------------------------------------------------------
# parameters (synthetic, deterministic)
# ----------------------------------------------------------------------------
def init_params(key, C, M):
    ks = jax.random.split(key, 12)
    H1, OC = C * 16, C * 64
    p = {}
    p["lin1_w"] = jax.random.normal(ks[0], (M, H1), jnp.float32) * 0.2
    p["lin1_b"] = jax.random.normal(ks[1], (1, H1), jnp.float32) * 0.1
    p["lin2_w"] = jax.random.normal(ks[2], (H1, OC), jnp.float32) * 0.05
    p["lin2_b"] = jax.random.normal(ks[3], (1, OC), jnp.float32) * 0.1
    # conv weights stored as [tap = ky*3+kx, cin, cout]
    p["conv1_w"] = jax.random.normal(ks[4], (9, 2 * C, C), jnp.float32) * 0.1
    p["conv1_b"] = jax.random.normal(ks[5], (1, C), jnp.float32) * 0.1
    p["gn_gamma"] = 1.0 + 0.1 * jax.random.normal(ks[6], (1, C), jnp.float32)
    p["gn_beta"] = 0.1 * jax.random.normal(ks[7], (1, C), jnp.float32)
    p["conv2_w"] = jax.random.normal(ks[8], (9, C, C), jnp.float32) * 0.1
    p["conv2_b"] = jax.random.normal(ks[9], (1, C), jnp.float32) * 0.1
    p["gate_w"] = jax.random.normal(ks[10], (C, 1), jnp.float32) * 0.1
    p["gate_b"] = jax.random.normal(ks[11], (1, 1), jnp.float32) * 0.1
    return p


# ----------------------------------------------------------------------------
# pure-JAX reference (correctness check)
# ----------------------------------------------------------------------------
def reference(image_nchw, message, params, H, W):
    B, C = image_nchw.shape[0], image_nchw.shape[1]
    img = image_nchw.transpose(0, 2, 3, 1)                        # NHWC
    h = jax.nn.relu(message @ params["lin1_w"] + params["lin1_b"])
    m2 = h @ params["lin2_w"] + params["lin2_b"]
    msg_sp = m2.reshape(B, C, 8, 8).transpose(0, 2, 3, 1)         # (B,8,8,C)
    Ly = jnp.asarray(_bilinear_matrix(H, 8))
    Lx = jnp.asarray(_bilinear_matrix(W, 8))
    up = jnp.einsum('hi,wj,bijc->bhwc', Ly, Lx, msg_sp)
    combined = jnp.concatenate([img, up], axis=-1)                # (B,H,W,2C)
    w1_hwio = params["conv1_w"].reshape(3, 3, 2 * C, C)
    y = lax.conv_general_dilated(combined, w1_hwio, (1, 1), 'SAME',
                                 dimension_numbers=('NHWC', 'HWIO', 'NHWC'))
    y = y + params["conv1_b"].reshape(1, 1, 1, C)
    yg = y.reshape(B, H, W, 8, C // 8)
    mean = yg.mean(axis=(1, 2, 4), keepdims=True)
    var = yg.var(axis=(1, 2, 4), keepdims=True)
    yn = ((yg - mean) / jnp.sqrt(var + 1e-5)).reshape(B, H, W, C)
    yn = yn * params["gn_gamma"].reshape(1, 1, 1, C) + params["gn_beta"].reshape(1, 1, 1, C)
    act = jax.nn.relu(yn)
    w2_hwio = params["conv2_w"].reshape(3, 3, C, C)
    mod = lax.conv_general_dilated(act, w2_hwio, (1, 1), 'SAME',
                                   dimension_numbers=('NHWC', 'HWIO', 'NHWC'))
    mod = mod + params["conv2_b"].reshape(1, 1, 1, C)
    gate = jax.nn.sigmoid(jnp.einsum('bhwc,co->bhwo', img, params["gate_w"])
                          + params["gate_b"].reshape(1, 1, 1, 1))
    out = img + gate * mod
    return out.transpose(0, 3, 1, 2)


if __name__ == "__main__":
    B, C, H, W = 2, 16, 16, 16      # feature_channels=16 (divisible by 8 for GroupNorm)
    M = 8                           # message_channels
    key = jax.random.PRNGKey(0)
    k_img, k_msg, k_param = jax.random.split(key, 3)
    image = jax.random.normal(k_img, (B, C, H, W), jnp.float32)
    message = jax.random.normal(k_msg, (B, M), jnp.float32)
    params = init_params(k_param, C, M)

    out = jax.block_until_ready(message_injector(image, message, params))

    with jax.default_matmul_precision("highest"):
        ref = jax.block_until_ready(reference(image, message, params, H, W))

    assert out.shape == (B, C, H, W)
    err = float(jnp.max(jnp.abs(out - ref)))
    assert err < 1e-2, f"max abs err {err}"
    print("KERNEL_OK")
</pallas_src>

<mosaic_0001>
module attributes {stable_mosaic.version = 11 : i64} {
  func.func @_inject_kernel(%arg0: i32, %arg1: memref<1x16x256xf32, #tpu.memory_space<vmem>>, %arg2: memref<1x16x64xf32, #tpu.memory_space<vmem>>, %arg3: memref<64x256xf32, #tpu.memory_space<vmem>>, %arg4: memref<9x256xf32, #tpu.memory_space<vmem>>, %arg5: memref<17x288xf32, #tpu.memory_space<vmem>>, %arg6: memref<16x144xf32, #tpu.memory_space<vmem>>, %arg7: memref<17x4xf32, #tpu.memory_space<vmem>>, %arg8: memref<16x16xf32, #tpu.memory_space<vmem>>, %arg9: memref<1x16x256xf32, #tpu.memory_space<vmem>>, %arg10: memref<288x256xf32, #tpu.memory_space<vmem>>) attributes {dimension_semantics = [#tpu.dimension_semantics<parallel>], iteration_bounds = array<i64: 2>, scalar_prefetch = 0 : i64, scratch_operands = 1 : i64, tpu.core_type = #tpu.core_type<tc>, window_params = [{transform_indices = @transform_0, window_bounds = array<i64: 1, 16, 256>}, {transform_indices = @transform_1, window_bounds = array<i64: 1, 16, 64>}, {pipeline_mode = #tpu.pipeline_mode<synchronous>, transform_indices = @transform_2, window_bounds = array<i64: 64, 256>}, {pipeline_mode = #tpu.pipeline_mode<synchronous>, transform_indices = @transform_3, window_bounds = array<i64: 9, 256>}, {pipeline_mode = #tpu.pipeline_mode<synchronous>, transform_indices = @transform_4, window_bounds = array<i64: 17, 288>}, {pipeline_mode = #tpu.pipeline_mode<synchronous>, transform_indices = @transform_5, window_bounds = array<i64: 16, 144>}, {pipeline_mode = #tpu.pipeline_mode<synchronous>, transform_indices = @transform_6, window_bounds = array<i64: 17, 4>}, {pipeline_mode = #tpu.pipeline_mode<synchronous>, transform_indices = @transform_7, window_bounds = array<i64: 16, 16>}, {transform_indices = @transform_8, window_bounds = array<i64: 1, 16, 256>}]} {
    %c0 = arith.constant 0 : index
    %c0_0 = arith.constant 0 : index
    %c0_1 = arith.constant 0 : index
    %0 = vector.load %arg1[%c0, %c0_0, %c0_1] : memref<1x16x256xf32, #tpu.memory_space<vmem>>, vector<1x16x256xf32>
    %1 = vector.shape_cast %0 : vector<1x16x256xf32> to vector<16x256xf32>
    %c0_2 = arith.constant 0 : index
    %c0_3 = arith.constant 0 : index
    %2 = vector.load %arg4[%c0_2, %c0_3] : memref<9x256xf32, #tpu.memory_space<vmem>>, vector<9x256xf32>
    %c0_4 = arith.constant 0 : index
    %c0_5 = arith.constant 0 : index
    %3 = vector.load %arg7[%c0_4, %c0_5] : memref<17x4xf32, #tpu.memory_space<vmem>>, vector<17x4xf32>
    %4 = vector.extract_strided_slice %3 {offsets = [0, 0], sizes = [17, 1], strides = [1, 1]} : vector<17x4xf32> to vector<17x1xf32>
    %5 = vector.extract_strided_slice %3 {offsets = [0, 1], sizes = [16, 1], strides = [1, 1]} : vector<17x4xf32> to vector<16x1xf32>
    %6 = vector.extract_strided_slice %3 {offsets = [0, 2], sizes = [16, 1], strides = [1, 1]} : vector<17x4xf32> to vector<16x1xf32>
    %7 = vector.extract_strided_slice %3 {offsets = [0, 3], sizes = [16, 1], strides = [1, 1]} : vector<17x4xf32> to vector<16x1xf32>
    %c0_6 = arith.constant 0 : index
    %c0_7 = arith.constant 0 : index
    %c0_8 = arith.constant 0 : index
    %8 = vector.load %arg2[%c0_6, %c0_7, %c0_8] : memref<1x16x64xf32, #tpu.memory_space<vmem>>, vector<1x16x64xf32>
    %9 = vector.shape_cast %8 : vector<1x16x64xf32> to vector<16x64xf32>
    %c0_9 = arith.constant 0 : index
    %c0_10 = arith.constant 0 : index
    %10 = vector.load %arg3[%c0_9, %c0_10] : memref<64x256xf32, #tpu.memory_space<vmem>>, vector<64x256xf32>
    %cst = arith.constant dense<0.000000e+00> : vector<16x256xf32>
    %11 = tpu.matmul %9, %10, %cst {dimension_numbers = #tpu.dot_dimension_numbers<[1], [0], [0], [1], [0, 0, 1, 1], [], []>} : vector<16x64xf32>, vector<64x256xf32>, vector<16x256xf32> -> vector<16x256xf32>
    %12 = vector.extract_strided_slice %2 {offsets = [0, 0], sizes = [1, 256], strides = [1, 1]} : vector<9x256xf32> to vector<1x256xf32>
    %c17_i32 = arith.constant 17 : i32
    %13 = tpu.dynamic_rotate %1 by %c17_i32 dim 1 : vector<16x256xf32>, i32 -> vector<16x256xf32>
    %14 = vector.broadcast %12 : vector<1x256xf32> to vector<16x256xf32>
    %15 = arith.mulf %13, %14 : vector<16x256xf32>
    %c17_i32_11 = arith.constant 17 : i32
    %16 = tpu.dynamic_rotate %11 by %c17_i32_11 dim 1 : vector<16x256xf32>, i32 -> vector<16x256xf32>
    %17 = vector.broadcast %12 : vector<1x256xf32> to vector<16x256xf32>
    %18 = arith.mulf %16, %17 : vector<16x256xf32>
    %c0_12 = arith.constant 0 : index
    %c0_13 = arith.constant 0 : index
    %19 = vector.load %arg10[%c0_12, %c0_13] : memref<288x256xf32, #tpu.memory_space<vmem>>, vector<16x256xf32>
    tpu.vector_store %arg10[%c0_12, %c0_13], %15 {strides = array<i32>} : memref<288x256xf32, #tpu.memory_space<vmem>>, vector<16x256xf32>,
    %c16 = arith.constant 16 : index
    %c0_14 = arith.constant 0 : index
    %20 = vector.load %arg10[%c16, %c0_14] : memref<288x256xf32, #tpu.memory_space<vmem>>, vector<16x256xf32>
    tpu.vector_store %arg10[%c16, %c0_14], %18 {strides = array<i32>} : memref<288x256xf32, #tpu.memory_space<vmem>>, vector<16x256xf32>,
    %21 = vector.extract_strided_slice %2 {offsets = [1, 0], sizes = [1, 256], strides = [1, 1]} : vector<9x256xf32> to vector<1x256xf32>
    %c16_i32 = arith.constant 16 : i32
    %22 = tpu.dynamic_rotate %1 by %c16_i32 dim 1 : vector<16x256xf32>, i32 -> vector<16x256xf32>
    %23 = vector.broadcast %21 : vector<1x256xf32> to vector<16x256xf32>
    %24 = arith.mulf %22, %23 : vector<16x256xf32>
    %c16_i32_15 = arith.constant 16 : i32
    %25 = tpu.dynamic_rotate %11 by %c16_i32_15 dim 1 : vector<16x256xf32>, i32 -> vector<16x256xf32>
    %26 = vector.broadcast %21 : vector<1x256xf32> to vector<16x256xf32>
    %27 = arith.mulf %25, %26 : vector<16x256xf32>
    %c32 = arith.constant 32 : index
    %c0_16 = arith.constant 0 : index
    %28 = vector.load %arg10[%c32, %c0_16] : memref<288x256xf32, #tpu.memory_space<vmem>>, vector<16x256xf32>
    tpu.vector_store %arg10[%c32, %c0_16], %24 {strides = array<i32>} : memref<288x256xf32, #tpu.memory_space<vmem>>, vector<16x256xf32>,
    %c48 = arith.constant 48 : index
    %c0_17 = arith.constant 0 : index
    %29 = vector.load %arg10[%c48, %c0_17] : memref<288x256xf32, #tpu.memory_space<vmem>>, vector<16x256xf32>
    tpu.vector_store %arg10[%c48, %c0_17], %27 {strides = array<i32>} : memref<288x256xf32, #tpu.memory_space<vmem>>, vector<16x256xf32>,
    %30 = vector.extract_strided_slice %2 {offsets = [2, 0], sizes = [1, 256], strides = [1, 1]} : vector<9x256xf32> to vector<1x256xf32>
    %c15_i32 = arith.constant 15 : i32
    %31 = tpu.dynamic_rotate %1 by %c15_i32 dim 1 : vector<16x256xf32>, i32 -> vector<16x256xf32>
    %32 = vector.broadcast %30 : vector<1x256xf32> to vector<16x256xf32>
    %33 = arith.mulf %31, %32 : vector<16x256xf32>
    %c15_i32_18 = arith.constant 15 : i32
    %34 = tpu.dynamic_rotate %11 by %c15_i32_18 dim 1 : vector<16x256xf32>, i32 -> vector<16x256xf32>
    %35 = vector.broadcast %30 : vector<1x256xf32> to vector<16x256xf32>
    %36 = arith.mulf %34, %35 : vector<16x256xf32>
    %c64 = arith.constant 64 : index
    %c0_19 = arith.constant 0 : index
    %37 = vector.load %arg10[%c64, %c0_19] : memref<288x256xf32, #tpu.memory_space<vmem>>, vector<16x256xf32>
    tpu.vector_store %arg10[%c64, %c0_19], %33 {strides = array<i32>} : memref<288x256xf32, #tpu.memory_space<vmem>>, vector<16x256xf32>,
    %c80 = arith.constant 80 : index
    %c0_20 = arith.constant 0 : index
    %38 = vector.load %arg10[%c80, %c0_20] : memref<288x256xf32, #tpu.memory_space<vmem>>, vector<16x256xf32>
    tpu.vector_store %arg10[%c80, %c0_20], %36 {strides = array<i32>} : memref<288x256xf32, #tpu.memory_space<vmem>>, vector<16x256xf32>,
    %39 = vector.extract_strided_slice %2 {offsets = [3, 0], sizes = [1, 256], strides = [1, 1]} : vector<9x256xf32> to vector<1x256xf32>
    %c1_i32 = arith.constant 1 : i32
    %40 = tpu.dynamic_rotate %1 by %c1_i32 dim 1 : vector<16x256xf32>, i32 -> vector<16x256xf32>
    %41 = vector.broadcast %39 : vector<1x256xf32> to vector<16x256xf32>
    %42 = arith.mulf %40, %41 : vector<16x256xf32>
    %c1_i32_21 = arith.constant 1 : i32
    %43 = tpu.dynamic_rotate %11 by %c1_i32_21 dim 1 : vector<16x256xf32>, i32 -> vector<16x256xf32>
    %44 = vector.broadcast %39 : vector<1x256xf32> to vector<16x256xf32>
    %45 = arith.mulf %43, %44 : vector<16x256xf32>
    %c96 = arith.constant 96 : index
    %c0_22 = arith.constant 0 : index
    %46 = vector.load %arg10[%c96, %c0_22] : memref<288x256xf32, #tpu.memory_space<vmem>>, vector<16x256xf32>
    tpu.vector_store %arg10[%c96, %c0_22], %42 {strides = array<i32>} : memref<288x256xf32, #tpu.memory_space<vmem>>, vector<16x256xf32>,
    %c112 = arith.constant 112 : index
    %c0_23 = arith.constant 0 : index
    %47 = vector.load %arg10[%c112, %c0_23] : memref<288x256xf32, #tpu.memory_space<vmem>>, vector<16x256xf32>
    tpu.vector_store %arg10[%c112, %c0_23], %45 {strides = array<i32>} : memref<288x256xf32, #tpu.memory_space<vmem>>, vector<16x256xf32>,
    %c128 = arith.constant 128 : index
    %c0_24 = arith.constant 0 : index
    %48 = vector.load %arg10[%c128, %c0_24] : memref<288x256xf32, #tpu.memory_space<vmem>>, vector<16x256xf32>
    tpu.vector_store %arg10[%c128, %c0_24], %1 {strides = array<i32>} : memref<288x256xf32, #tpu.memory_space<vmem>>, vector<16x256xf32>,
    %c144 = arith.constant 144 : index
    %c0_25 = arith.constant 0 : index
    %49 = vector.load %arg10[%c144, %c0_25] : memref<288x256xf32, #tpu.memory_space<vmem>>, vector<16x256xf32>
    tpu.vector_store %arg10[%c144, %c0_25], %11 {strides = array<i32>} : memref<288x256xf32, #tpu.memory_space<vmem>>, vector<16x256xf32>,
    %50 = vector.extract_strided_slice %2 {offsets = [5, 0], sizes = [1, 256], strides = [1, 1]} : vector<9x256xf32> to vector<1x256xf32>
    %c255_i32 = arith.constant 255 : i32
    %51 = tpu.dynamic_rotate %1 by %c255_i32 dim 1 : vector<16x256xf32>, i32 -> vector<16x256xf32>
    %52 = vector.broadcast %50 : vector<1x256xf32> to vector<16x256xf32>
    %53 = arith.mulf %51, %52 : vector<16x256xf32>
    %c255_i32_26 = arith.constant 255 : i32
    %54 = tpu.dynamic_rotate %11 by %c255_i32_26 dim 1 : vector<16x256xf32>, i32 -> vector<16x256xf32>
    %55 = vector.broadcast %50 : vector<1x256xf32> to vector<16x256xf32>
    %56 = arith.mulf %54, %55 : vector<16x256xf32>
    %c160 = arith.constant 160 : index
    %c0_27 = arith.constant 0 : index
    %57 = vector.load %arg10[%c160, %c0_27] : memref<288x256xf32, #tpu.memory_space<vmem>>, vector<16x256xf32>
    tpu.vector_store %arg10[%c160, %c0_27], %53 {strides = array<i32>} : memref<288x256xf32, #tpu.memory_space<vmem>>, vector<16x256xf32>,
    %c176 = arith.constant 176 : index
    %c0_28 = arith.constant 0 : index
    %58 = vector.load %arg10[%c176, %c0_28] : memref<288x256xf32, #tpu.memory_space<vmem>>, vector<16x256xf32>
    tpu.vector_store %arg10[%c176, %c0_28], %56 {strides = array<i32>} : memref<288x256xf32, #tpu.memory_space<vmem>>, vector<16x256xf32>,
    %59 = vector.extract_strided_slice %2 {offsets = [6, 0], sizes = [1, 256], strides = [1, 1]} : vector<9x256xf32> to vector<1x256xf32>
    %c241_i32 = arith.constant 241 : i32
    %60 = tpu.dynamic_rotate %1 by %c241_i32 dim 1 : vector<16x256xf32>, i32 -> vector<16x256xf32>
    %61 = vector.broadcast %59 : vector<1x256xf32> to vector<16x256xf32>
    %62 = arith.mulf %60, %61 : vector<16x256xf32>
    %c241_i32_29 = arith.constant 241 : i32
    %63 = tpu.dynamic_rotate %11 by %c241_i32_29 dim 1 : vector<16x256xf32>, i32 -> vector<16x256xf32>
    %64 = vector.broadcast %59 : vector<1x256xf32> to vector<16x256xf32>
    %65 = arith.mulf %63, %64 : vector<16x256xf32>
    %c192 = arith.constant 192 : index
    %c0_30 = arith.constant 0 : index
    %66 = vector.load %arg10[%c192, %c0_30] : memref<288x256xf32, #tpu.memory_space<vmem>>, vector<16x256xf32>
    tpu.vector_store %arg10[%c192, %c0_30], %62 {strides = array<i32>} : memref<288x256xf32, #tpu.memory_space<vmem>>, vector<16x256xf32>,
    %c208 = arith.constant 208 : index
    %c0_31 = arith.constant 0 : index
    %67 = vector.load %arg10[%c208, %c0_31] : memref<288x256xf32, #tpu.memory_space<vmem>>, vector<16x256xf32>
    tpu.vector_store %arg10[%c208, %c0_31], %65 {strides = array<i32>} : memref<288x256xf32, #tpu.memory_space<vmem>>, vector<16x256xf32>,
    %68 = vector.extract_strided_slice %2 {offsets = [7, 0], sizes = [1, 256], strides = [1, 1]} : vector<9x256xf32> to vector<1x256xf32>
    %c240_i32 = arith.constant 240 : i32
    %69 = tpu.dynamic_rotate %1 by %c240_i32 dim 1 : vector<16x256xf32>, i32 -> vector<16x256xf32>
    %70 = vector.broadcast %68 : vector<1x256xf32> to vector<16x256xf32>
    %71 = arith.mulf %69, %70 : vector<16x256xf32>
    %c240_i32_32 = arith.constant 240 : i32
    %72 = tpu.dynamic_rotate %11 by %c240_i32_32 dim 1 : vector<16x256xf32>, i32 -> vector<16x256xf32>
    %73 = vector.broadcast %68 : vector<1x256xf32> to vector<16x256xf32>
    %74 = arith.mulf %72, %73 : vector<16x256xf32>
    %c224 = arith.constant 224 : index
    %c0_33 = arith.constant 0 : index
    %75 = vector.load %arg10[%c224, %c0_33] : memref<288x256xf32, #tpu.memory_space<vmem>>, vector<16x256xf32>
    tpu.vector_store %arg10[%c224, %c0_33], %71 {strides = array<i32>} : memref<288x256xf32, #tpu.memory_space<vmem>>, vector<16x256xf32>,
    %c240 = arith.constant 240 : index
    %c0_34 = arith.constant 0 : index
    %76 = vector.load %arg10[%c240, %c0_34] : memref<288x256xf32, #tpu.memory_space<vmem>>, vector<16x256xf32>
    tpu.vector_store %arg10[%c240, %c0_34], %74 {strides = array<i32>} : memref<288x256xf32, #tpu.memory_space<vmem>>, vector<16x256xf32>,
    %77 = vector.extract_strided_slice %2 {offsets = [8, 0], sizes = [1, 256], strides = [1, 1]} : vector<9x256xf32> to vector<1x256xf32>
    %c239_i32 = arith.constant 239 : i32
    %78 = tpu.dynamic_rotate %1 by %c239_i32 dim 1 : vector<16x256xf32>, i32 -> vector<16x256xf32>
    %79 = vector.broadcast %77 : vector<1x256xf32> to vector<16x256xf32>
    %80 = arith.mulf %78, %79 : vector<16x256xf32>
    %c239_i32_35 = arith.constant 239 : i32
    %81 = tpu.dynamic_rotate %11 by %c239_i32_35 dim 1 : vector<16x256xf32>, i32 -> vector<16x256xf32>
    %82 = vector.broadcast %77 : vector<1x256xf32> to vector<16x256xf32>
    %83 = arith.mulf %81, %82 : vector<16x256xf32>
    %c256 = arith.constant 256 : index
    %c0_36 = arith.constant 0 : index
    %84 = vector.load %arg10[%c256, %c0_36] : memref<288x256xf32, #tpu.memory_space<vmem>>, vector<16x256xf32>
    tpu.vector_store %arg10[%c256, %c0_36], %80 {strides = array<i32>} : memref<288x256xf32, #tpu.memory_space<vmem>>, vector<16x256xf32>,
    %c272 = arith.constant 272 : index
    %c0_37 = arith.constant 0 : index
    %85 = vector.load %arg10[%c272, %c0_37] : memref<288x256xf32, #tpu.memory_space<vmem>>, vector<16x256xf32>
    tpu.vector_store %arg10[%c272, %c0_37], %83 {strides = array<i32>} : memref<288x256xf32, #tpu.memory_space<vmem>>, vector<16x256xf32>,
    %c0_38 = arith.constant 0 : index
    %c0_39 = arith.constant 0 : index
    %86 = vector.load %arg5[%c0_38, %c0_39] : memref<17x288xf32, #tpu.memory_space<vmem>>, vector<17x288xf32>
    %c0_40 = arith.constant 0 : index
    %c0_41 = arith.constant 0 : index
    %87 = vector.load %arg10[%c0_40, %c0_41] : memref<288x256xf32, #tpu.memory_space<vmem>>, vector<288x256xf32>
    %cst_42 = arith.constant dense<0.000000e+00> : vector<17x256xf32>
    %88 = tpu.matmul %86, %87, %cst_42 {dimension_numbers = #tpu.dot_dimension_numbers<[1], [0], [0], [1], [0, 0, 1, 1], [], []>} : vector<17x288xf32>, vector<288x256xf32>, vector<17x256xf32> -> vector<17x256xf32>
    %89 = vector.broadcast %4 : vector<17x1xf32> to vector<17x256xf32>
    %90 = arith.addf %88, %89 : vector<17x256xf32>
    %91 = vector.extract_strided_slice %90 {offsets = [0, 0], sizes = [16, 256], strides = [1, 1]} : vector<17x256xf32> to vector<16x256xf32>
    %92 = vector.extract_strided_slice %90 {offsets = [16, 0], sizes = [1, 256], strides = [1, 1]} : vector<17x256xf32> to vector<1x256xf32>
    %93 = arith.negf %92 : vector<1x256xf32>
    %94 = math.exp %93 : vector<1x256xf32>
    %cst_43 = arith.constant 1.000000e+00 : f32
    %95 = vector.broadcast %cst_43 : f32 to vector<1x256xf32>
    %96 = arith.addf %95, %94 : vector<1x256xf32>
    %97 = arith.divf %95, %96 : vector<1x256xf32>
    %cst_44 = arith.constant dense<0.000000e+00> : vector<16xf32>
    %98 = vector.multi_reduction <add>, %91, %cst_44 [1] : vector<16x256xf32> to vector<16xf32>
    %99 = vector.shape_cast %98 : vector<16xf32> to vector<16x1xf32>
    %100 = arith.mulf %91, %91 : vector<16x256xf32>
    %cst_45 = arith.constant dense<0.000000e+00> : vector<16xf32>
    %101 = vector.multi_reduction <add>, %100, %cst_45 [1] : vector<16x256xf32> to vector<16xf32>
    %102 = vector.shape_cast %101 : vector<16xf32> to vector<16x1xf32>
    %c0_46 = arith.constant 0 : index
    %c0_47 = arith.constant 0 : index
    %103 = vector.load %arg8[%c0_46, %c0_47] : memref<16x16xf32, #tpu.memory_space<vmem>>, vector<16x16xf32>
    %104 = tpu.concatenate %99, %102 in 1 : vector<16x1xf32>, vector<16x1xf32> -> vector<16x2xf32>
    %cst_48 = arith.constant dense<0.000000e+00> : vector<16x2xf32>
    %105 = tpu.matmul %103, %104, %cst_48 {dimension_numbers = #tpu.dot_dimension_numbers<[1], [0], [0], [1], [0, 0, 1, 1], [], []>} : vector<16x16xf32>, vector<16x2xf32>, vector<16x2xf32> -> vector<16x2xf32>
    %106 = vector.extract_strided_slice %105 {offsets = [0, 0], sizes = [16, 1], strides = [1, 1]} : vector<16x2xf32> to vector<16x1xf32>
    %107 = vector.extract_strided_slice %105 {offsets = [0, 1], sizes = [16, 1], strides = [1, 1]} : vector<16x2xf32> to vector<16x1xf32>
    %108 = arith.mulf %106, %106 : vector<16x1xf32>
    %109 = arith.subf %107, %108 : vector<16x1xf32>
    %cst_49 = arith.constant 9.99999974E-6 : f32
    %110 = vector.broadcast %cst_49 : f32 to vector<16x1xf32>
    %111 = arith.addf %109, %110 : vector<16x1xf32>
    %112 = math.rsqrt %111 : vector<16x1xf32>
    %113 = vector.broadcast %106 : vector<16x1xf32> to vector<16x256xf32>
    %114 = arith.subf %91, %113 : vector<16x256xf32>
    %115 = vector.broadcast %112 : vector<16x1xf32> to vector<16x256xf32>
    %116 = arith.mulf %114, %115 : vector<16x256xf32>
    %117 = vector.broadcast %5 : vector<16x1xf32> to vector<16x256xf32>
    %118 = arith.mulf %116, %117 : vector<16x256xf32>
    %119 = vector.broadcast %6 : vector<16x1xf32> to vector<16x256xf32>
    %120 = arith.addf %118, %119 : vector<16x256xf32>
    %cst_50 = arith.constant 0.000000e+00 : f32
    %121 = vector.broadcast %cst_50 : f32 to vector<16x256xf32>
    %122 = arith.maximumf %120, %121 : vector<16x256xf32>
    %c17_i32_51 = arith.constant 17 : i32
    %123 = tpu.dynamic_rotate %122 by %c17_i32_51 dim 1 : vector<16x256xf32>, i32 -> vector<16x256xf32>
    %124 = vector.extract_strided_slice %2 {offsets = [0, 0], sizes = [1, 256], strides = [1, 1]} : vector<9x256xf32> to vector<1x256xf32>
    %125 = vector.broadcast %124 : vector<1x256xf32> to vector<16x256xf32>
    %126 = arith.mulf %123, %125 : vector<16x256xf32>
    %c0_52 = arith.constant 0 : index
    %c0_53 = arith.constant 0 : index
    %127 = vector.load %arg10[%c0_52, %c0_53] : memref<288x256xf32, #tpu.memory_space<vmem>>, vector<16x256xf32>
    tpu.vector_store %arg10[%c0_52, %c0_53], %126 {strides = array<i32>} : memref<288x256xf32, #tpu.memory_space<vmem>>, vector<16x256xf32>,
    %c16_i32_54 = arith.constant 16 : i32
    %128 = tpu.dynamic_rotate %122 by %c16_i32_54 dim 1 : vector<16x256xf32>, i32 -> vector<16x256xf32>
    %129 = vector.extract_strided_slice %2 {offsets = [1, 0], sizes = [1, 256], strides = [1, 1]} : vector<9x256xf32> to vector<1x256xf32>
    %130 = vector.broadcast %129 : vector<1x256xf32> to vector<16x256xf32>
    %131 = arith.mulf %128, %130 : vector<16x256xf32>
    %c16_55 = arith.constant 16 : index
    %c0_56 = arith.constant 0 : index
    %132 = vector.load %arg10[%c16_55, %c0_56] : memref<288x256xf32, #tpu.memory_space<vmem>>, vector<16x256xf32>
    tpu.vector_store %arg10[%c16_55, %c0_56], %131 {strides = array<i32>} : memref<288x256xf32, #tpu.memory_space<vmem>>, vector<16x256xf32>,
    %c15_i32_57 = arith.constant 15 : i32
    %133 = tpu.dynamic_rotate %122 by %c15_i32_57 dim 1 : vector<16x256xf32>, i32 -> vector<16x256xf32>
    %134 = vector.extract_strided_slice %2 {offsets = [2, 0], sizes = [1, 256], strides = [1, 1]} : vector<9x256xf32> to vector<1x256xf32>
    %135 = vector.broadcast %134 : vector<1x256xf32> to vector<16x256xf32>
    %136 = arith.mulf %133, %135 : vector<16x256xf32>
    %c32_58 = arith.constant 32 : index
    %c0_59 = arith.constant 0 : index
    %137 = vector.load %arg10[%c32_58, %c0_59] : memref<288x256xf32, #tpu.memory_space<vmem>>, vector<16x256xf32>
    tpu.vector_store %arg10[%c32_58, %c0_59], %136 {strides = array<i32>} : memref<288x256xf32, #tpu.memory_space<vmem>>, vector<16x256xf32>,
    %c1_i32_60 = arith.constant 1 : i32
    %138 = tpu.dynamic_rotate %122 by %c1_i32_60 dim 1 : vector<16x256xf32>, i32 -> vector<16x256xf32>
    %139 = vector.extract_strided_slice %2 {offsets = [3, 0], sizes = [1, 256], strides = [1, 1]} : vector<9x256xf32> to vector<1x256xf32>
    %140 = vector.broadcast %139 : vector<1x256xf32> to vector<16x256xf32>
    %141 = arith.mulf %138, %140 : vector<16x256xf32>
    %c48_61 = arith.constant 48 : index
    %c0_62 = arith.constant 0 : index
    %142 = vector.load %arg10[%c48_61, %c0_62] : memref<288x256xf32, #tpu.memory_space<vmem>>, vector<16x256xf32>
    tpu.vector_store %arg10[%c48_61, %c0_62], %141 {strides = array<i32>} : memref<288x256xf32, #tpu.memory_space<vmem>>, vector<16x256xf32>,
    %c64_63 = arith.constant 64 : index
    %c0_64 = arith.constant 0 : index
    %143 = vector.load %arg10[%c64_63, %c0_64] : memref<288x256xf32, #tpu.memory_space<vmem>>, vector<16x256xf32>
    tpu.vector_store %arg10[%c64_63, %c0_64], %122 {strides = array<i32>} : memref<288x256xf32, #tpu.memory_space<vmem>>, vector<16x256xf32>,
    %c255_i32_65 = arith.constant 255 : i32
    %144 = tpu.dynamic_rotate %122 by %c255_i32_65 dim 1 : vector<16x256xf32>, i32 -> vector<16x256xf32>
    %145 = vector.extract_strided_slice %2 {offsets = [5, 0], sizes = [1, 256], strides = [1, 1]} : vector<9x256xf32> to vector<1x256xf32>
    %146 = vector.broadcast %145 : vector<1x256xf32> to vector<16x256xf32>
    %147 = arith.mulf %144, %146 : vector<16x256xf32>
    %c80_66 = arith.constant 80 : index
    %c0_67 = arith.constant 0 : index
    %148 = vector.load %arg10[%c80_66, %c0_67] : memref<288x256xf32, #tpu.memory_space<vmem>>, vector<16x256xf32>
    tpu.vector_store %arg10[%c80_66, %c0_67], %147 {strides = array<i32>} : memref<288x256xf32, #tpu.memory_space<vmem>>, vector<16x256xf32>,
    %c241_i32_68 = arith.constant 241 : i32
    %149 = tpu.dynamic_rotate %122 by %c241_i32_68 dim 1 : vector<16x256xf32>, i32 -> vector<16x256xf32>
    %150 = vector.extract_strided_slice %2 {offsets = [6, 0], sizes = [1, 256], strides = [1, 1]} : vector<9x256xf32> to vector<1x256xf32>
    %151 = vector.broadcast %150 : vector<1x256xf32> to vector<16x256xf32>
    %152 = arith.mulf %149, %151 : vector<16x256xf32>
    %c96_69 = arith.constant 96 : index
    %c0_70 = arith.constant 0 : index
    %153 = vector.load %arg10[%c96_69, %c0_70] : memref<288x256xf32, #tpu.memory_space<vmem>>, vector<16x256xf32>
    tpu.vector_store %arg10[%c96_69, %c0_70], %152 {strides = array<i32>} : memref<288x256xf32, #tpu.memory_space<vmem>>, vector<16x256xf32>,
    %c240_i32_71 = arith.constant 240 : i32
    %154 = tpu.dynamic_rotate %122 by %c240_i32_71 dim 1 : vector<16x256xf32>, i32 -> vector<16x256xf32>
    %155 = vector.extract_strided_slice %2 {offsets = [7, 0], sizes = [1, 256], strides = [1, 1]} : vector<9x256xf32> to vector<1x256xf32>
    %156 = vector.broadcast %155 : vector<1x256xf32> to vector<16x256xf32>
    %157 = arith.mulf %154, %156 : vector<16x256xf32>
    %c112_72 = arith.constant 112 : index
    %c0_73 = arith.constant 0 : index
    %158 = vector.load %arg10[%c112_72, %c0_73] : memref<288x256xf32, #tpu.memory_space<vmem>>, vector<16x256xf32>
    tpu.vector_store %arg10[%c112_72, %c0_73], %157 {strides = array<i32>} : memref<288x256xf32, #tpu.memory_space<vmem>>, vector<16x256xf32>,
    %c239_i32_74 = arith.constant 239 : i32
    %159 = tpu.dynamic_rotate %122 by %c239_i32_74 dim 1 : vector<16x256xf32>, i32 -> vector<16x256xf32>
    %160 = vector.extract_strided_slice %2 {offsets = [8, 0], sizes = [1, 256], strides = [1, 1]} : vector<9x256xf32> to vector<1x256xf32>
    %161 = vector.broadcast %160 : vector<1x256xf32> to vector<16x256xf32>
    %162 = arith.mulf %159, %161 : vector<16x256xf32>
    %c128_75 = arith.constant 128 : index
    %c0_76 = arith.constant 0 : index
    %163 = vector.load %arg10[%c128_75, %c0_76] : memref<288x256xf32, #tpu.memory_space<vmem>>, vector<16x256xf32>
    tpu.vector_store %arg10[%c128_75, %c0_76], %162 {strides = array<i32>} : memref<288x256xf32, #tpu.memory_space<vmem>>, vector<16x256xf32>,
    %c0_77 = arith.constant 0 : index
    %c0_78 = arith.constant 0 : index
    %164 = vector.load %arg6[%c0_77, %c0_78] : memref<16x144xf32, #tpu.memory_space<vmem>>, vector<16x144xf32>
    %c0_79 = arith.constant 0 : index
    %c0_80 = arith.constant 0 : index
    %165 = vector.load %arg10[%c0_79, %c0_80] : memref<288x256xf32, #tpu.memory_space<vmem>>, vector<144x256xf32>
    %cst_81 = arith.constant dense<0.000000e+00> : vector<16x256xf32>
    %166 = tpu.matmul %164, %165, %cst_81 {dimension_numbers = #tpu.dot_dimension_numbers<[1], [0], [0], [1], [0, 0, 1, 1], [], []>} : vector<16x144xf32>, vector<144x256xf32>, vector<16x256xf32> -> vector<16x256xf32>
    %167 = vector.broadcast %7 : vector<16x1xf32> to vector<16x256xf32>
    %168 = arith.addf %166, %167 : vector<16x256xf32>
    %169 = vector.broadcast %97 : vector<1x256xf32> to vector<16x256xf32>
    %170 = arith.mulf %169, %168 : vector<16x256xf32>
    %171 = arith.addf %1, %170 : vector<16x256xf32>
    %c0_82 = arith.constant 0 : index
    %c0_83 = arith.constant 0 : index
    %c0_84 = arith.constant 0 : index
    %172 = vector.load %arg9[%c0_82, %c0_83, %c0_84] : memref<1x16x256xf32, #tpu.memory_space<vmem>>, vector<1x16x256xf32>
    %173 = vector.shape_cast %172 : vector<1x16x256xf32> to vector<16x256xf32>
    %174 = vector.shape_cast %171 : vector<16x256xf32> to vector<1x16x256xf32>
    tpu.vector_store %arg9[%c0_82, %c0_83, %c0_84], %174 {strides = array<i32>} : memref<1x16x256xf32, #tpu.memory_space<vmem>>, vector<1x16x256xf32>,
    return
  }
  func.func @transform_0(%arg0: i32) -> (i32, i32, i32) {
    %c0_i32 = arith.constant 0 : i32
    %c0_i32_0 = arith.constant 0 : i32
    %c0_i32_1 = arith.constant 0 : i32
    return %arg0, %c0_i32, %c0_i32_0 : i32, i32, i32
  }
  func.func @transform_1(%arg0: i32) -> (i32, i32, i32) {
    %c0_i32 = arith.constant 0 : i32
    %c0_i32_0 = arith.constant 0 : i32
    %c0_i32_1 = arith.constant 0 : i32
    return %arg0, %c0_i32, %c0_i32_0 : i32, i32, i32
  }
  func.func @transform_2(%arg0: i32) -> (i32, i32) {
    %c0_i32 = arith.constant 0 : i32
    %c0_i32_0 = arith.constant 0 : i32
    %c0_i32_1 = arith.constant 0 : i32
    return %c0_i32, %c0_i32_0 : i32, i32
  }
  func.func @transform_3(%arg0: i32) -> (i32, i32) {
    %c0_i32 = arith.constant 0 : i32
    %c0_i32_0 = arith.constant 0 : i32
    %c0_i32_1 = arith.constant 0 : i32
    return %c0_i32, %c0_i32_0 : i32, i32
  }
  func.func @transform_4(%arg0: i32) -> (i32, i32) {
    %c0_i32 = arith.constant 0 : i32
    %c0_i32_0 = arith.constant 0 : i32
    %c0_i32_1 = arith.constant 0 : i32
    return %c0_i32, %c0_i32_0 : i32, i32
  }
  func.func @transform_5(%arg0: i32) -> (i32, i32) {
    %c0_i32 = arith.constant 0 : i32
    %c0_i32_0 = arith.constant 0 : i32
    %c0_i32_1 = arith.constant 0 : i32
    return %c0_i32, %c0_i32_0 : i32, i32
  }
  func.func @transform_6(%arg0: i32) -> (i32, i32) {
    %c0_i32 = arith.constant 0 : i32
    %c0_i32_0 = arith.constant 0 : i32
    %c0_i32_1 = arith.constant 0 : i32
    return %c0_i32, %c0_i32_0 : i32, i32
  }
  func.func @transform_7(%arg0: i32) -> (i32, i32) {
    %c0_i32 = arith.constant 0 : i32
    %c0_i32_0 = arith.constant 0 : i32
    %c0_i32_1 = arith.constant 0 : i32
    return %c0_i32, %c0_i32_0 : i32, i32
  }
  func.func @transform_8(%arg0: i32) -> (i32, i32, i32) {
    %c0_i32 = arith.constant 0 : i32
    %c0_i32_0 = arith.constant 0 : i32
    %c0_i32_1 = arith.constant 0 : i32
    return %arg0, %c0_i32, %c0_i32_0 : i32, i32, i32
  }
}

</mosaic_0001>

<llo_original>
// kernel: _forward.1
$region0: #{_forward.1}
  #allocation0 [shape = 'u32[]', space=smem, size = 0x4, offset = 0x4, fixed_abs, tag = 'smem constant byte address 0x4 - core index']
  #allocation1 [shape = 'u32[72,128]{1,0:T(1,128)}', space=vmem, size = 0x9000, scoped, tag = 'internal scratch']
  #allocation2 [shape = 'f32[288,256]{1,0:T(8,128)}', space=vmem, size = 0x48000, scoped, tag = 'scratch operand']
  %s0 = inlined_call_operand.vmem [shape: f32[2,16,256], index: 0, kind: input, shape index: {}]
  %s1 = inlined_call_operand.vmem [shape: f32[2,16,64], index: 1, kind: input, shape index: {}]
  %s2 = inlined_call_operand.vmem [shape: f32[64,256], index: 2, kind: input, shape index: {}]
  %s3 = inlined_call_operand.vmem [shape: f32[9,256], index: 3, kind: input, shape index: {}]
  %s4 = inlined_call_operand.vmem [shape: f32[17,288], index: 4, kind: input, shape index: {}]
  %s5 = inlined_call_operand.vmem [shape: f32[16,144], index: 5, kind: input, shape index: {}]
  %s6 = inlined_call_operand.vmem [shape: f32[17,4], index: 6, kind: input, shape index: {}]
  %s7 = inlined_call_operand.vmem [shape: f32[16,16], index: 7, kind: input, shape index: {}]
  %s8 = inlined_call_operand.vmem [shape: f32[2,16,256], index: 8, kind: output, shape index: {}]
  %s9 = sld [smem:[#allocation0]]
  $region65: #{_forward.1} parent=0
    _
  %s11 = ssub.s32 1, %s9
  %s12 = scalar_select 0, %s11, %s9
  loop: start=0, step=1, limit=4
  $region2: #{_forward.1} parent=0 // loop_pre_header
    _
  $region3: #{_forward.1} parent=0 // loop_header
    %s14 = sphi 0, %s18
    %p15 = scmp.ge.s32.totalorder %s14, 4
    %s24 = sphi 0, %s26
    %s27 = sphi 0, %s24
    %s28 = sphi 0, %s27
    %s44 = sphi 0, %s28
    %s50 = sphi 0, %s52
    %s53 = sphi 0, %s50
    %s54 = sphi 0, %s53
    %s70 = sphi 0, %s54
    %s74 = sphi 0, %s74
    %s76 = sphi 0, %s74
    %s77 = sphi 0, %s76
    %s91 = sphi 0, %s77
    %s95 = sphi 0, %s95
    %s97 = sphi 0, %s95
    %s98 = sphi 0, %s97
    %s112 = sphi 0, %s98
    %s116 = sphi 0, %s116
    %s118 = sphi 0, %s116
    %s119 = sphi 0, %s118
    %s133 = sphi 0, %s119
    %s137 = sphi 0, %s137
    %s139 = sphi 0, %s137
    %s140 = sphi 0, %s139
    %s154 = sphi 0, %s140
    %s158 = sphi 0, %s158
    %s160 = sphi 0, %s158
    %s161 = sphi 0, %s160
    %s175 = sphi 0, %s161
    %s179 = sphi 0, %s179
    %s181 = sphi 0, %s179
    %s182 = sphi 0, %s181
    %s196 = sphi 0, %s182
    %s202 = sphi 0, %s204
    %s205 = sphi 0, %s202
    %s206 = sphi 0, %s205
    %s222 = sphi 0, %s206
  $region4: #{_forward.1} parent=0 // loop_header_branch
    %17 = sbr.rel (%p15) target = $region8
  $region5: #{_forward.1} parent=0 // loop_body
    %s19 = ssub.s32 %s14, 1
    %s20 = ssub.s32 %s14, 2
    %s21 = sadd.s32 %s14, 1
    %s22 = ssub.s32 %s14, %s21
    %p23 = scmp.eq.s32.totalorder %s22, 0
    %s25 = sadd.s32 %s24, 1
    %s26 = scalar_select %p23, %s24, %s25
    %p29 = pneg %p23
    %p30 = scmp.eq.s32.totalorder %s14, 1
    %p31 = por %p29, %p30
    %p32 = scmp.ne.s32.totalorder %s24, %s27
    %p33 = scmp.eq.s32.totalorder %s14, 0
    %p34 = por %p32, %p33
    %p35 = scmp.ne.s32.totalorder %s24, %s27
    %p36 = scmp.eq.s32.totalorder %s19, 1
    %p37 = por %p35, %p36
    %p38 = scmp.ne.s32.totalorder %s27, %s28
    %p39 = scmp.eq.s32.totalorder %s19, 0
    %p40 = por %p38, %p39
    %p41 = scmp.ne.s32.totalorder %s27, %s28
    %p42 = scmp.eq.s32.totalorder %s20, 1
    %p43 = por %p41, %p42
    %p45 = scmp.ne.s32.totalorder %s28, %s44
    %p46 = scmp.eq.s32.totalorder %s20, 0
    %p47 = por %p45, %p46
    %s48 = ssub.s32 %s14, %s21
    %p49 = scmp.eq.s32.totalorder %s48, 0
    %s51 = sadd.s32 %s50, 1
    %s52 = scalar_select %p49, %s50, %s51
    %p55 = pneg %p49
    %p56 = scmp.eq.s32.totalorder %s14, 1
    %p57 = por %p55, %p56
    %p58 = scmp.ne.s32.totalorder %s50, %s53
    %p59 = scmp.eq.s32.totalorder %s14, 0
    %p60 = por %p58, %p59
    %p61 = scmp.ne.s32.totalorder %s50, %s53
    %p62 = scmp.eq.s32.totalorder %s19, 1
    %p63 = por %p61, %p62
    %p64 = scmp.ne.s32.totalorder %s53, %s54
    %p65 = scmp.eq.s32.totalorder %s19, 0
    %p66 = por %p64, %p65
    %p67 = scmp.ne.s32.totalorder %s53, %s54
    %p68 = scmp.eq.s32.totalorder %s20, 1
    %p69 = por %p67, %p68
    %p71 = scmp.ne.s32.totalorder %s54, %s70
    %p72 = scmp.eq.s32.totalorder %s20, 0
    %p73 = por %p71, %p72
    %s75 = sadd.s32 %s74, 1
    %p78 = scmp.eq.s32.totalorder %s14, 1
    %p79 = scmp.ne.s32.totalorder %s74, %s76
    %p80 = scmp.eq.s32.totalorder %s14, 0
    %p81 = por %p79, %p80
    %p82 = scmp.ne.s32.totalorder %s74, %s76
    %p83 = scmp.eq.s32.totalorder %s19, 1
    %p84 = por %p82, %p83
    %p85 = scmp.ne.s32.totalorder %s76, %s77
    %p86 = scmp.eq.s32.totalorder %s19, 0
    %p87 = por %p85, %p86
    %p88 = scmp.ne.s32.totalorder %s76, %s77
    %p89 = scmp.eq.s32.totalorder %s20, 1
    %p90 = por %p88, %p89
    %p92 = scmp.ne.s32.totalorder %s77, %s91
    %p93 = scmp.eq.s32.totalorder %s20, 0
    %p94 = por %p92, %p93
    %s96 = sadd.s32 %s95, 1
    %p99 = scmp.eq.s32.totalorder %s14, 1
    %p100 = scmp.ne.s32.totalorder %s95, %s97
    %p101 = scmp.eq.s32.totalorder %s14, 0
    %p102 = por %p100, %p101
    %p103 = scmp.ne.s32.totalorder %s95, %s97
    %p104 = scmp.eq.s32.totalorder %s19, 1
    %p105 = por %p103, %p104
    %p106 = scmp.ne.s32.totalorder %s97, %s98
    %p107 = scmp.eq.s32.totalorder %s19, 0
    %p108 = por %p106, %p107
    %p109 = scmp.ne.s32.totalorder %s97, %s98
    %p110 = scmp.eq.s32.totalorder %s20, 1
    %p111 = por %p109, %p110
    %p113 = scmp.ne.s32.totalorder %s98, %s112
    %p114 = scmp.eq.s32.totalorder %s20, 0
    %p115 = por %p113, %p114
    %s117 = sadd.s32 %s116, 1
    %p120 = scmp.eq.s32.totalorder %s14, 1
    %p121 = scmp.ne.s32.totalorder %s116, %s118
    %p122 = scmp.eq.s32.totalorder %s14, 0
    %p123 = por %p121, %p122
    %p124 = scmp.ne.s32.totalorder %s116, %s118
    %p125 = scmp.eq.s32.totalorder %s19, 1
    %p126 = por %p124, %p125
    %p127 = scmp.ne.s32.totalorder %s118, %s119
    %p128 = scmp.eq.s32.totalorder %s19, 0
    %p129 = por %p127, %p128
    %p130 = scmp.ne.s32.totalorder %s118, %s119
    %p131 = scmp.eq.s32.totalorder %s20, 1
    %p132 = por %p130, %p131
    %p134 = scmp.ne.s32.totalorder %s119, %s133
    %p135 = scmp.eq.s32.totalorder %s20, 0
    %p136 = por %p134, %p135
    %s138 = sadd.s32 %s137, 1
    %p141 = scmp.eq.s32.totalorder %s14, 1
    %p142 = scmp.ne.s32.totalorder %s137, %s139
    %p143 = scmp.eq.s32.totalorder %s14, 0
    %p144 = por %p142, %p143
    %p145 = scmp.ne.s32.totalorder %s137, %s139
    %p146 = scmp.eq.s32.totalorder %s19, 1
    %p147 = por %p145, %p146
    %p148 = scmp.ne.s32.totalorder %s139, %s140
    %p149 = scmp.eq.s32.totalorder %s19, 0
    %p150 = por %p148, %p149
    %p151 = scmp.ne.s32.totalorder %s139, %s140
    %p152 = scmp.eq.s32.totalorder %s20, 1
    %p153 = por %p151, %p152
    %p155 = scmp.ne.s32.totalorder %s140, %s154
    %p156 = scmp.eq.s32.totalorder %s20, 0
    %p157 = por %p155, %p156
    %s159 = sadd.s32 %s158, 1
    %p162 = scmp.eq.s32.totalorder %s14, 1
    %p163 = scmp.ne.s32.totalorder %s158, %s160
    %p164 = scmp.eq.s32.totalorder %s14, 0
    %p165 = por %p163, %p164
    %p166 = scmp.ne.s32.totalorder %s158, %s160
    %p167 = scmp.eq.s32.totalorder %s19, 1
    %p168 = por %p166, %p167
    %p169 = scmp.ne.s32.totalorder %s160, %s161
    %p170 = scmp.eq.s32.totalorder %s19, 0
    %p171 = por %p169, %p170
    %p172 = scmp.ne.s32.totalorder %s160, %s161
    %p173 = scmp.eq.s32.totalorder %s20, 1
    %p174 = por %p172, %p173
    %p176 = scmp.ne.s32.totalorder %s161, %s175
    %p177 = scmp.eq.s32.totalorder %s20, 0
    %p178 = por %p176, %p177
    %s180 = sadd.s32 %s179, 1
    %p183 = scmp.eq.s32.totalorder %s14, 1
    %p184 = scmp.ne.s32.totalorder %s179, %s181
    %p185 = scmp.eq.s32.totalorder %s14, 0
    %p186 = por %p184, %p185
    %p187 = scmp.ne.s32.totalorder %s179, %s181
    %p188 = scmp.eq.s32.totalorder %s19, 1
    %p189 = por %p187, %p188
    %p190 = scmp.ne.s32.totalorder %s181, %s182
    %p191 = scmp.eq.s32.totalorder %s19, 0
    %p192 = por %p190, %p191
    %p193 = scmp.ne.s32.totalorder %s181, %s182
    %p194 = scmp.eq.s32.totalorder %s20, 1
    %p195 = por %p193, %p194
    %p197 = scmp.ne.s32.totalorder %s182, %s196
    %p198 = scmp.eq.s32.totalorder %s20, 0
    %p199 = por %p197, %p198
    %s200 = ssub.s32 %s14, %s21
    %p201 = scmp.eq.s32.totalorder %s200, 0
    %s203 = sadd.s32 %s202, 1
    %s204 = scalar_select %p201, %s202, %s203
    %p207 = pneg %p201
    %p208 = scmp.eq.s32.totalorder %s14, 1
    %p209 = por %p207, %p208
    %p210 = scmp.ne.s32.totalorder %s202, %s205
    %p211 = scmp.eq.s32.totalorder %s14, 0
    %p212 = por %p210, %p211
    %p213 = scmp.ne.s32.totalorder %s202, %s205
    %p214 = scmp.eq.s32.totalorder %s19, 1
    %p215 = por %p213, %p214
    %p216 = scmp.ne.s32.totalorder %s205, %s206
    %p217 = scmp.eq.s32.totalorder %s19, 0
    %p218 = por %p216, %p217
    %p219 = scmp.ne.s32.totalorder %s205, %s206
    %p220 = scmp.eq.s32.totalorder %s20, 1
    %p221 = por %p219, %p220
    %p223 = scmp.ne.s32.totalorder %s206, %s222
    %p224 = scmp.eq.s32.totalorder %s20, 0
    %p225 = por %p223, %p224
    %p226 = scmp.le.s32.totalorder 1, %s14
    %p227 = scmp.lt.s32.totalorder %s14, 3
    %p228 = pnand %p226, %p227
    %p229 = pneg %p228
    // Predicated region
    $region9: #{_forward.1} parent=5 // pred_check
      _
    $region10: #{_forward.1} parent=5 // pred_check_branch
      %231 = sbr.rel (%p228) target = $region12
    $region11: #{_forward.1} parent=5 // pred_region
      %s232 = ssub.s32 %s14, 1
      // Predicated region
      $region13: #{_forward.1} parent=11 // pred_check
        %p233 = pneg %p87
      $region14: #{_forward.1} parent=11 // pred_check_branch
        %235 = sbr.rel (%p233) target = $region16
      $region15: #{_forward.1} parent=11 // pred_region
        _
      $region16: #{_forward.1} parent=11 // pred_fallthru
        _
      // Predicated region
      $region17: #{_forward.1} parent=11 // pred_check
        %p236 = pneg %p108
      $region18: #{_forward.1} parent=11 // pred_check_branch
        %238 = sbr.rel (%p236) target = $region20
      $region19: #{_forward.1} parent=11 // pred_region
        _
      $region20: #{_forward.1} parent=11 // pred_fallthru
        _
      // Predicated region
      $region21: #{_forward.1} parent=11 // pred_check
        %p239 = pneg %p129
      $region22: #{_forward.1} parent=11 // pred_check_branch
        %241 = sbr.rel (%p239) target = $region24
      $region23: #{_forward.1} parent=11 // pred_region
        _
      $region24: #{_forward.1} parent=11 // pred_fallthru
        _
      // Predicated region
      $region25: #{_forward.1} parent=11 // pred_check
        %p242 = pneg %p150
      $region26: #{_forward.1} parent=11 // pred_check_branch
        %244 = sbr.rel (%p242) target = $region28
      $region27: #{_forward.1} parent=11 // pred_region
        _
      $region28: #{_forward.1} parent=11 // pred_fallthru
        _
      // Predicated region
      $region29: #{_forward.1} parent=11 // pred_check
        %p245 = pneg %p171
      $region30: #{_forward.1} parent=11 // pred_check_branch
        %247 = sbr.rel (%p245) target = $region32
      $region31: #{_forward.1} parent=11 // pred_region
        _
      $region32: #{_forward.1} parent=11 // pred_fallthru
        _
      // Predicated region
      $region33: #{_forward.1} parent=11 // pred_check
        %p248 = pneg %p192
      $region34: #{_forward.1} parent=11 // pred_check_branch
        %250 = sbr.rel (%p248) target = $region36
      $region35: #{_forward.1} parent=11 // pred_region
        _
      $region36: #{_forward.1} parent=11 // pred_fallthru
        _
    $region12: #{_forward.1} parent=5 // pred_fallthru
      _
    %p251 = scmp.lt.s32.totalorder %s14, 2
    // Predicated region
    $region37: #{_forward.1} parent=5 // pred_check
      %p252 = pneg %p251
    $region38: #{_forward.1} parent=5 // pred_check_branch
      %254 = sbr.rel (%p252) target = $region40
    $region39: #{_forward.1} parent=5 // pred_region
      // Predicated region
      $region41: #{_forward.1} parent=39 // pred_check
        %p255 = pneg %p34
      $region42: #{_forward.1} parent=39 // pred_check_branch
        %257 = sbr.rel (%p255) target = $region44
      $region43: #{_forward.1} parent=39 // pred_region
        %p258 = scmp.lt.s32.totalorder %s14, 1
        %s259 = scalar_select %p258, %s14, 1
        %s260 = smul.addr %s259, 4
        %s261 = smul.addr %s260, 8
        %s262 = scalar_lea.vmem %s0, %s261
      $region44: #{_forward.1} parent=39 // pred_fallthru
        _
      // Predicated region
      $region45: #{_forward.1} parent=39 // pred_check
        %p263 = pneg %p60
      $region46: #{_forward.1} parent=39 // pred_check_branch
        %265 = sbr.rel (%p263) target = $region48
      $region47: #{_forward.1} parent=39 // pred_region
        %p266 = scmp.lt.s32.totalorder %s14, 1
        %s267 = scalar_select %p266, %s14, 1
        %s268 = smul.addr %s267, 2
        %s269 = smul.addr %s268, 8
        %s270 = scalar_lea.vmem %s1, %s269
      $region48: #{_forward.1} parent=39 // pred_fallthru
        _
    $region40: #{_forward.1} parent=5 // pred_fallthru
      _
    %p271 = scmp.le.s32.totalorder 1, %s14
    %p272 = scmp.lt.s32.totalorder %s14, 3
    %p273 = pnand %p271, %p272
    %p274 = pneg %p273
    // Predicated region
    $region49: #{_forward.1} parent=5 // pred_check
      _
    $region50: #{_forward.1} parent=5 // pred_check_branch
      %276 = sbr.rel (%p273) target = $region52
    $region51: #{_forward.1} parent=5 // pred_region
      %s277 = ssub.s32 %s14, 1
      %p278 = scmp.lt.s32.totalorder %s19, 1
      %s279 = scalar_select %p278, %s19, 1
      %s280 = smul.addr %s279, 4
      %s281 = smul.addr %s280, 8
      %s282 = scalar_lea.vmem %s0, %s281
      %p283 = pneg %p40
      %p284 = pneg %p37
      %p285 = scmp.lt.s32.totalorder %s19, 1
      %s286 = scalar_select %p285, %s19, 1
      %s287 = smul.addr %s286, 2
      %s288 = smul.addr %s287, 8
      %s289 = scalar_lea.vmem %s1, %s288
      %p290 = pneg %p66
      %p291 = pneg %p63
      %p292 = pneg %p87
      %p293 = pneg %p84
      %p294 = pneg %p108
      %p295 = pneg %p105
      %p296 = pneg %p129
      %p297 = pneg %p126
      %p298 = pneg %p150
      %p299 = pneg %p147
      %p300 = pneg %p171
      %p301 = pneg %p168
      %p302 = pneg %p192
      %p303 = pneg %p189
      %p304 = pneg %p218
      %p305 = pneg %p215
      %p306 = scmp.lt.s32.totalorder %s19, 1
      %s307 = scalar_select %p306, %s19, 1
      %s308 = smul.addr %s307, 4
      %s309 = smul.addr %s308, 8
      %s310 = scalar_lea.vmem %s8, %s309
      %p311 = scmp.lt.s32.totalorder %s19, 1
      %s312 = scalar_select %p311, %s19, 1
      %s313 = smul.addr %s312, 4
      %s314 = smul.addr %s313, 8
      %s315 = scalar_lea.vmem %s0, %s314
      %p316 = scmp.lt.s32.totalorder %s19, 1
      %s317 = scalar_select %p316, %s19, 1
      %s318 = smul.addr %s317, 2
      %s319 = smul.addr %s318, 8
      %s320 = scalar_lea.vmem %s1, %s319
      %p321 = scmp.lt.s32.totalorder %s19, 1
      %s322 = scalar_select %p321, %s19, 1
      %s323 = smul.addr %s322, 4
      %s324 = smul.addr %s323, 8
      %s325 = scalar_lea.vmem %s8, %s324
      %v326 = vld [vmem:[%s315] sm:$0xff]
      %v327 = vld [vmem:[%s315 + $0x8] sm:$0xff]
      %v328 = vld [vmem:[%s315 + $0x10] sm:$0xff]
      %v329 = vld [vmem:[%s315 + $0x18] sm:$0xff]
      %v330 = vld [vmem:[%s3] sm:$0xff]
      %v331 = vld [vmem:[%s3 + $0x8] sm:$0xff]
      %v332 = vld [vmem:[%s3 + $0x10] sm:$0x1]
      %v333 = vld [vmem:[%s3 + $0x18] sm:$0x1]
      %v334 = vld [vmem:[%s6] sm:$0xff]
      %v335 = vld [vmem:[%s6 + $0x8] sm:$0xff]
      %v336 = vld [vmem:[%s6 + $0x10] sm:$0x1]
      %v337 = vld [vmem:[%s320] sm:$0xff]
      %v338 = vld [vmem:[%s320 + $0x8] sm:$0xff]
      %v339 = vld [vmem:[%s2] sm:$0xff]
      %v340 = vld [vmem:[%s2 + $0x8] sm:$0xff]
      %v341 = vld [vmem:[%s2 + $0x10] sm:$0xff]
      %v342 = vld [vmem:[%s2 + $0x18] sm:$0xff]
      %v343 = vld [vmem:[%s2 + $0x20] sm:$0xff]
      %v344 = vld [vmem:[%s2 + $0x28] sm:$0xff]
      %v345 = vld [vmem:[%s2 + $0x30] sm:$0xff]
      %v346 = vld [vmem:[%s2 + $0x38] sm:$0xff]
      %v347 = vld [vmem:[%s2 + $0x40] sm:$0xff]
      %v348 = vld [vmem:[%s2 + $0x48] sm:$0xff]
      %v349 = vld [vmem:[%s2 + $0x50] sm:$0xff]
      %v350 = vld [vmem:[%s2 + $0x58] sm:$0xff]
      %v351 = vld [vmem:[%s2 + $0x60] sm:$0xff]
      %v352 = vld [vmem:[%s2 + $0x68] sm:$0xff]
      %v353 = vld [vmem:[%s2 + $0x70] sm:$0xff]
      %v354 = vld [vmem:[%s2 + $0x78] sm:$0xff]
      %vm355 = vcmask 523264
      %v357 = vsel %vm355, %v337, 0
      %v360 = vsel %vm355, %v338, 0
      %362 = vmatpush.msra.mxu0 0.0
      %363 = vmatpush.msra.mxu0 0.0
      %364 = vmatpush.msra.mxu0 0.0
      %365 = vmatpush.msra.mxu0 0.0
      %366 = vmatpush.msra.mxu0 0.0
      %367 = vmatpush.msra.mxu0 0.0
      %368 = vmatpush.msra.mxu0 0.0
      %369 = vmatpush.msra.mxu0 0.0
      %370 = vmatpush.msra.mxu0 %v353
      %371 = vmatpush.msra.mxu0 %v351
      %372 = vmatpush.msra.mxu0 %v349
      %373 = vmatpush.msra.mxu0 %v347
      %374 = vmatpush.msra.mxu0 %v345
      %375 = vmatpush.msra.mxu0 %v343
      %376 = vmatpush.msra.mxu0 %v341
      %377 = vmatpush.msra.mxu0 %v339
      %378 = vmatmul.f32.gmra.mxu0 %v357
      %v379 = vpop.f32.mrf.mxu0
      %v380 = vadd.f32 0.0, %v379
      %381 = vmatmul.f32.gmra.mxu0 %v360
      %v382 = vpop.f32.mrf.mxu0
      %v383 = vadd.f32 0.0, %v382
      %384 = vdwg.mxu0
      %385 = vmatpush.msra.mxu0 0.0
      %386 = vmatpush.msra.mxu0 0.0
      %387 = vmatpush.msra.mxu0 0.0
      %388 = vmatpush.msra.mxu0 0.0
      %389 = vmatpush.msra.mxu0 0.0
      %390 = vmatpush.msra.mxu0 0.0
      %391 = vmatpush.msra.mxu0 0.0
      %392 = vmatpush.msra.mxu0 0.0
      %393 = vmatpush.msra.mxu0 %v354
      %394 = vmatpush.msra.mxu0 %v352
      %395 = vmatpush.msra.mxu0 %v350
      %396 = vmatpush.msra.mxu0 %v348
      %397 = vmatpush.msra.mxu0 %v346
      %398 = vmatpush.msra.mxu0 %v344
      %399 = vmatpush.msra.mxu0 %v342
      %400 = vmatpush.msra.mxu0 %v340
      %401 = vmatmul.f32.gmra.mxu0 %v357
      %v402 = vpop.f32.mrf.mxu0
      %v403 = vadd.f32 0.0, %v402
      %404 = vmatmul.f32.gmra.mxu0 %v360
      %v405 = vpop.f32.mrf.mxu0
      %v406 = vadd.f32 0.0, %v405
      %407 = vdwg.mxu0
      %408 = vrot.lane.b32.xlu0 %v326, 17
      %v409 = vpop.permute.xlu0 %408
      %410 = vrot.lane.b32.xlu0 %v328, 17
      %v411 = vpop.permute.xlu0 %410
      %412 = vrot.lane.b32.xlu0 %v327, 17
      %v413 = vpop.permute.xlu0 %412
      %414 = vrot.lane.b32.xlu0 %v329, 17
      %v415 = vpop.permute.xlu0 %414
      %v416 = vlaneseq
      %v417 = vand.u32 %v416, 127
      %vm418 = vcmp.lt.s32.totalorder %v417, 17
      %v419 = vsel %vm418, %v409, %v413
      %v420 = vsel %vm418, %v411, %v415
      %v421 = vsel %vm418, %v413, %v409
      %v422 = vsel %vm418, %v415, %v411
      %v423 = vperm.slane %v330, 0
      %v424 = vperm.slane %v331, 0
      %v425 = vmul.f32 %v421, %v423
      %v426 = vmul.f32 %v419, %v424
      %v427 = vmul.f32 %v422, %v423
      %v428 = vmul.f32 %v420, %v424
      %429 = vrot.lane.b32.xlu0 %v380, 17
      %v430 = vpop.permute.xlu0 %429
      %431 = vrot.lane.b32.xlu0 %v383, 17
      %v432 = vpop.permute.xlu0 %431
      %433 = vrot.lane.b32.xlu0 %v403, 17
      %v434 = vpop.permute.xlu0 %433
      %435 = vrot.lane.b32.xlu0 %v406, 17
      %v436 = vpop.permute.xlu0 %435
      %v437 = vsel %vm418, %v430, %v434
      %v438 = vsel %vm418, %v432, %v436
      %v439 = vsel %vm418, %v434, %v430
      %v440 = vsel %vm418, %v436, %v432
      %v441 = vmul.f32 %v439, %v423
      %v442 = vmul.f32 %v437, %v424
      %v443 = vmul.f32 %v440, %v423
      %v444 = vmul.f32 %v438, %v424
      %445 = vst [vmem:[#allocation2] sm:$0xff] %v425
      %446 = vst [vmem:[#allocation2 + $0x8] sm:$0xff] %v426
      %447 = vst [vmem:[#allocation2 + $0x10] sm:$0xff] %v427
      %448 = vst [vmem:[#allocation2 + $0x18] sm:$0xff] %v428
      %449 = vst [vmem:[#allocation2 + $0x20] sm:$0xff] %v441
      %450 = vst [vmem:[#allocation2 + $0x28] sm:$0xff] %v442
      %451 = vst [vmem:[#allocation2 + $0x30] sm:$0xff] %v443
      %452 = vst [vmem:[#allocation2 + $0x38] sm:$0xff] %v444
      %453 = vrot.lane.b32.xlu0 %v326, 16
      %v454 = vpop.permute.xlu0 %453
      %455 = vrot.lane.b32.xlu0 %v328, 16
      %v456 = vpop.permute.xlu0 %455
      %457 = vrot.lane.b32.xlu0 %v327, 16
      %v458 = vpop.permute.xlu0 %457
      %459 = vrot.lane.b32.xlu0 %v329, 16
      %v460 = vpop.permute.xlu0 %459
      %vm461 = vcmp.lt.s32.totalorder %v417, 16
      %v462 = vsel %vm461, %v454, %v458
      %v463 = vsel %vm461, %v456, %v460
      %v464 = vsel %vm461, %v458, %v454
      %v465 = vsel %vm461, %v460, %v456
      %v466 = vperm.slane %v330, 1
      %v467 = vperm.slane %v331, 1
      %v468 = vmul.f32 %v464, %v466
      %v469 = vmul.f32 %v462, %v467
      %v470 = vmul.f32 %v465, %v466
      %v471 = vmul.f32 %v463, %v467
      %472 = vrot.lane.b32.xlu0 %v380, 16
      %v473 = vpop.permute.xlu0 %472
      %474 = vrot.lane.b32.xlu0 %v383, 16
      %v475 = vpop.permute.xlu0 %474
      %476 = vrot.lane.b32.xlu0 %v403, 16
      %v477 = vpop.permute.xlu0 %476
      %478 = vrot.lane.b32.xlu0 %v406, 16
      %v479 = vpop.permute.xlu0 %478
      %v480 = vsel %vm461, %v473, %v477
      %v481 = vsel %vm461, %v475, %v479
      %v482 = vsel %vm461, %v477, %v473
      %v483 = vsel %vm461, %v479, %v475
      %v484 = vmul.f32 %v482, %v466
      %v485 = vmul.f32 %v480, %v467
      %v486 = vmul.f32 %v483, %v466
      %v487 = vmul.f32 %v481, %v467
      %488 = vst [vmem:[#allocation2 + $0x40] sm:$0xff] %v468
      %489 = vst [vmem:[#allocation2 + $0x48] sm:$0xff] %v469
      %490 = vst [vmem:[#allocation2 + $0x50] sm:$0xff] %v470
      %491 = vst [vmem:[#allocation2 + $0x58] sm:$0xff] %v471
      %492 = vst [vmem:[#allocation2 + $0x60] sm:$0xff] %v484
      %493 = vst [vmem:[#allocation2 + $0x68] sm:$0xff] %v485
      %494 = vst [vmem:[#allocation2 + $0x70] sm:$0xff] %v486
      %495 = vst [vmem:[#allocation2 + $0x78] sm:$0xff] %v487
      %496 = vrot.lane.b32.xlu0 %v326, 15
      %v497 = vpop.permute.xlu0 %496
      %498 = vrot.lane.b32.xlu0 %v328, 15
      %v499 = vpop.permute.xlu0 %498
      %500 = vrot.lane.b32.xlu0 %v327, 15
      %v501 = vpop.permute.xlu0 %500
      %502 = vrot.lane.b32.xlu0 %v329, 15
      %v503 = vpop.permute.xlu0 %502
      %vm504 = vcmp.lt.s32.totalorder %v417, 15
      %v505 = vsel %vm504, %v497, %v501
      %v506 = vsel %vm504, %v499, %v503
      %v507 = vsel %vm504, %v501, %v497
      %v508 = vsel %vm504, %v503, %v499
      %v509 = vperm.slane %v330, 2
      %v510 = vperm.slane %v331, 2
      %v511 = vmul.f32 %v507, %v509
      %v512 = vmul.f32 %v505, %v510
      %v513 = vmul.f32 %v508, %v509
      %v514 = vmul.f32 %v506, %v510
      %515 = vrot.lane.b32.xlu0 %v380, 15
      %v516 = vpop.permute.xlu0 %515
      %517 = vrot.lane.b32.xlu0 %v383, 15
      %v518 = vpop.permute.xlu0 %517
      %519 = vrot.lane.b32.xlu0 %v403, 15
      %v520 = vpop.permute.xlu0 %519
      %521 = vrot.lane.b32.xlu0 %v406, 15
      %v522 = vpop.permute.xlu0 %521
      %v523 = vsel %vm504, %v516, %v520
      %v524 = vsel %vm504, %v518, %v522
      %v525 = vsel %vm504, %v520, %v516
      %v526 = vsel %vm504, %v522, %v518
      %v527 = vmul.f32 %v525, %v509
      %v528 = vmul.f32 %v523, %v510
      %v529 = vmul.f32 %v526, %v509
      %v530 = vmul.f32 %v524, %v510
      %531 = vst [vmem:[#allocation2 + $0x80] sm:$0xff] %v511
      %532 = vst [vmem:[#allocation2 + $0x88] sm:$0xff] %v512
      %533 = vst [vmem:[#allocation2 + $0x90] sm:$0xff] %v513
      %534 = vst [vmem:[#allocation2 + $0x98] sm:$0xff] %v514
      %535 = vst [vmem:[#allocation2 + $0xa0] sm:$0xff] %v527
      %536 = vst [vmem:[#allocation2 + $0xa8] sm:$0xff] %v528
      %537 = vst [vmem:[#allocation2 + $0xb0] sm:$0xff] %v529
      %538 = vst [vmem:[#allocation2 + $0xb8] sm:$0xff] %v530
      %539 = vrot.lane.b32.xlu0 %v326, 1
      %v540 = vpop.permute.xlu0 %539
      %541 = vrot.lane.b32.xlu0 %v328, 1
      %v542 = vpop.permute.xlu0 %541
      %543 = vrot.lane.b32.xlu0 %v327, 1
      %v544 = vpop.permute.xlu0 %543
      %545 = vrot.lane.b32.xlu0 %v329, 1
      %v546 = vpop.permute.xlu0 %545
      %vm547 = vcmp.lt.s32.totalorder %v417, 1
      %v548 = vsel %vm547, %v540, %v544
      %v549 = vsel %vm547, %v542, %v546
      %v550 = vsel %vm547, %v544, %v540
      %v551 = vsel %vm547, %v546, %v542
      %v552 = vperm.slane %v330, 3
      %v553 = vperm.slane %v331, 3
      %v554 = vmul.f32 %v550, %v552
      %v555 = vmul.f32 %v548, %v553
      %v556 = vmul.f32 %v551, %v552
      %v557 = vmul.f32 %v549, %v553
      %558 = vrot.lane.b32.xlu0 %v380, 1
      %v559 = vpop.permute.xlu0 %558
      %560 = vrot.lane.b32.xlu0 %v383, 1
      %v561 = vpop.permute.xlu0 %560
      %562 = vrot.lane.b32.xlu0 %v403, 1
      %v563 = vpop.permute.xlu0 %562
      %564 = vrot.lane.b32.xlu0 %v406, 1
      %v565 = vpop.permute.xlu0 %564
      %v566 = vsel %vm547, %v559, %v563
      %v567 = vsel %vm547, %v561, %v565
      %v568 = vsel %vm547, %v563, %v559
      %v569 = vsel %vm547, %v565, %v561
      %v570 = vmul.f32 %v568, %v552
      %v571 = vmul.f32 %v566, %v553
      %v572 = vmul.f32 %v569, %v552
      %v573 = vmul.f32 %v567, %v553
      %574 = vst [vmem:[#allocation2 + $0xc0] sm:$0xff] %v554
      %575 = vst [vmem:[#allocation2 + $0xc8] sm:$0xff] %v555
      %576 = vst [vmem:[#allocation2 + $0xd0] sm:$0xff] %v556
      %577 = vst [vmem:[#allocation2 + $0xd8] sm:$0xff] %v557
      %578 = vst [vmem:[#allocation2 + $0xe0] sm:$0xff] %v570
      %579 = vst [vmem:[#allocation2 + $0xe8] sm:$0xff] %v571
      %580 = vst [vmem:[#allocation2 + $0xf0] sm:$0xff] %v572
      %581 = vst [vmem:[#allocation2 + $0xf8] sm:$0xff] %v573
      %582 = vst [vmem:[#allocation2 + $0x100] sm:$0xff] %v326
      %583 = vst [vmem:[#allocation2 + $0x108] sm:$0xff] %v327
      %584 = vst [vmem:[#allocation2 + $0x110] sm:$0xff] %v328
      %585 = vst [vmem:[#allocation2 + $0x118] sm:$0xff] %v329
      %586 = vst [vmem:[#allocation2 + $0x120] sm:$0xff] %v380
      %587 = vst [vmem:[#allocation2 + $0x128] sm:$0xff] %v403
      %588 = vst [vmem:[#allocation2 + $0x130] sm:$0xff] %v383
      %589 = vst [vmem:[#allocation2 + $0x138] sm:$0xff] %v406
      %590 = vrot.lane.b32.xlu0 %v326, 127
      %v591 = vpop.permute.xlu0 %590
      %592 = vrot.lane.b32.xlu0 %v328, 127
      %v593 = vpop.permute.xlu0 %592
      %594 = vrot.lane.b32.xlu0 %v327, 127
      %v595 = vpop.permute.xlu0 %594
      %596 = vrot.lane.b32.xlu0 %v329, 127
      %v597 = vpop.permute.xlu0 %596
      %vm598 = vcmp.lt.s32.totalorder %v417, 127
      %v599 = vsel %vm598, %v591, %v595
      %v600 = vsel %vm598, %v593, %v597
      %v601 = vsel %vm598, %v595, %v591
      %v602 = vsel %vm598, %v597, %v593
      %v603 = vperm.slane %v330, 5
      %v604 = vperm.slane %v331, 5
      %v605 = vmul.f32 %v599, %v603
      %v606 = vmul.f32 %v601, %v604
      %v607 = vmul.f32 %v600, %v603
      %v608 = vmul.f32 %v602, %v604
      %609 = vrot.lane.b32.xlu0 %v380, 127
      %v610 = vpop.permute.xlu0 %609
      %611 = vrot.lane.b32.xlu0 %v383, 127
      %v612 = vpop.permute.xlu0 %611
      %613 = vrot.lane.b32.xlu0 %v403, 127
      %v614 = vpop.permute.xlu0 %613
      %615 = vrot.lane.b32.xlu0 %v406, 127
      %v616 = vpop.permute.xlu0 %615
      %v617 = vsel %vm598, %v610, %v614
      %v618 = vsel %vm598, %v612, %v616
      %v619 = vsel %vm598, %v614, %v610
      %v620 = vsel %vm598, %v616, %v612
      %v621 = vmul.f32 %v617, %v603
      %v622 = vmul.f32 %v619, %v604
      %v623 = vmul.f32 %v618, %v603
      %v624 = vmul.f32 %v620, %v604
      %625 = vst [vmem:[#allocation2 + $0x140] sm:$0xff] %v605
      %626 = vst [vmem:[#allocation2 + $0x148] sm:$0xff] %v606
      %627 = vst [vmem:[#allocation2 + $0x150] sm:$0xff] %v607
      %628 = vst [vmem:[#allocation2 + $0x158] sm:$0xff] %v608
      %629 = vst [vmem:[#allocation2 + $0x160] sm:$0xff] %v621
      %630 = vst [vmem:[#allocation2 + $0x168] sm:$0xff] %v622
      %631 = vst [vmem:[#allocation2 + $0x170] sm:$0xff] %v623
      %632 = vst [vmem:[#allocation2 + $0x178] sm:$0xff] %v624
      %633 = vrot.lane.b32.xlu0 %v326, 113
      %v634 = vpop.permute.xlu0 %633
      %635 = vrot.lane.b32.xlu0 %v328, 113
      %v636 = vpop.permute.xlu0 %635
      %637 = vrot.lane.b32.xlu0 %v327, 113
      %v638 = vpop.permute.xlu0 %637
      %639 = vrot.lane.b32.xlu0 %v329, 113
      %v640 = vpop.permute.xlu0 %639
      %vm641 = vcmp.lt.s32.totalorder %v417, 113
      %v642 = vsel %vm641, %v634, %v638
      %v643 = vsel %vm641, %v636, %v640
      %v644 = vsel %vm641, %v638, %v634
      %v645 = vsel %vm641, %v640, %v636
      %v646 = vperm.slane %v330, 6
      %v647 = vperm.slane %v331, 6
      %v648 = vmul.f32 %v642, %v646
      %v649 = vmul.f32 %v644, %v647
      %v650 = vmul.f32 %v643, %v646
      %v651 = vmul.f32 %v645, %v647
      %652 = vrot.lane.b32.xlu0 %v380, 113
      %v653 = vpop.permute.xlu0 %652
      %654 = vrot.lane.b32.xlu0 %v383, 113
      %v655 = vpop.permute.xlu0 %654
      %656 = vrot.lane.b32.xlu0 %v403, 113
      %v657 = vpop.permute.xlu0 %656
      %658 = vrot.lane.b32.xlu0 %v406, 113
      %v659 = vpop.permute.xlu0 %658
      %v660 = vsel %vm641, %v653, %v657
      %v661 = vsel %vm641, %v655, %v659
      %v662 = vsel %vm641, %v657, %v653
      %v663 = vsel %vm641, %v659, %v655
      %v664 = vmul.f32 %v660, %v646
      %v665 = vmul.f32 %v662, %v647
      %v666 = vmul.f32 %v661, %v646
      %v667 = vmul.f32 %v663, %v647
      %668 = vst [vmem:[#allocation2 + $0x180] sm:$0xff] %v648
      %669 = vst [vmem:[#allocation2 + $0x188] sm:$0xff] %v649
      %670 = vst [vmem:[#allocation2 + $0x190] sm:$0xff] %v650
      %671 = vst [vmem:[#allocation2 + $0x198] sm:$0xff] %v651
      %672 = vst [vmem:[#allocation2 + $0x1a0] sm:$0xff] %v664
      %673 = vst [vmem:[#allocation2 + $0x1a8] sm:$0xff] %v665
      %674 = vst [vmem:[#allocation2 + $0x1b0] sm:$0xff] %v666
      %675 = vst [vmem:[#allocation2 + $0x1b8] sm:$0xff] %v667
      %676 = vrot.lane.b32.xlu0 %v326, 112
      %v677 = vpop.permute.xlu0 %676
      %678 = vrot.lane.b32.xlu0 %v328, 112
      %v679 = vpop.permute.xlu0 %678
      %680 = vrot.lane.b32.xlu0 %v327, 112
      %v681 = vpop.permute.xlu0 %680
      %682 = vrot.lane.b32.xlu0 %v329, 112
      %v683 = vpop.permute.xlu0 %682
      %vm684 = vcmp.lt.s32.totalorder %v417, 112
      %v685 = vsel %vm684, %v677, %v681
      %v686 = vsel %vm684, %v679, %v683
      %v687 = vsel %vm684, %v681, %v677
      %v688 = vsel %vm684, %v683, %v679
      %v689 = vperm.slane %v330, 7
      %v690 = vperm.slane %v331, 7
      %v691 = vmul.f32 %v685, %v689
      %v692 = vmul.f32 %v687, %v690
      %v693 = vmul.f32 %v686, %v689
      %v694 = vmul.f32 %v688, %v690
      %695 = vrot.lane.b32.xlu0 %v380, 112
      %v696 = vpop.permute.xlu0 %695
      %697 = vrot.lane.b32.xlu0 %v383, 112
      %v698 = vpop.permute.xlu0 %697
      %699 = vrot.lane.b32.xlu0 %v403, 112
      %v700 = vpop.permute.xlu0 %699
      %701 = vrot.lane.b32.xlu0 %v406, 112
      %v702 = vpop.permute.xlu0 %701
      %v703 = vsel %vm684, %v696, %v700
      %v704 = vsel %vm684, %v698, %v702
      %v705 = vsel %vm684, %v700, %v696
      %v706 = vsel %vm684, %v702, %v698
      %v707 = vmul.f32 %v703, %v689
      %v708 = vmul.f32 %v705, %v690
      %v709 = vmul.f32 %v704, %v689
      %v710 = vmul.f32 %v706, %v690
      %711 = vst [vmem:[#allocation2 + $0x1c0] sm:$0xff] %v691
      %712 = vst [vmem:[#allocation2 + $0x1c8] sm:$0xff] %v692
      %713 = vst [vmem:[#allocation2 + $0x1d0] sm:$0xff] %v693
      %714 = vst [vmem:[#allocation2 + $0x1d8] sm:$0xff] %v694
      %715 = vst [vmem:[#allocation2 + $0x1e0] sm:$0xff] %v707
      %716 = vst [vmem:[#allocation2 + $0x1e8] sm:$0xff] %v708
      %717 = vst [vmem:[#allocation2 + $0x1f0] sm:$0xff] %v709
      %718 = vst [vmem:[#allocation2 + $0x1f8] sm:$0xff] %v710
      %719 = vrot.lane.b32.xlu0 %v326, 111
      %v720 = vpop.permute.xlu0 %719
      %721 = vrot.lane.b32.xlu0 %v328, 111
      %v722 = vpop.permute.xlu0 %721
      %723 = vrot.lane.b32.xlu0 %v327, 111
      %v724 = vpop.permute.xlu0 %723
      %725 = vrot.lane.b32.xlu0 %v329, 111
      %v726 = vpop.permute.xlu0 %725
      %vm727 = vcmp.lt.s32.totalorder %v417, 111
      %v728 = vsel %vm727, %v720, %v724
      %v729 = vsel %vm727, %v722, %v726
      %v730 = vsel %vm727, %v724, %v720
      %v731 = vsel %vm727, %v726, %v722
      %v732 = vperm.slane %v332, 0
      %v733 = vperm.slane %v333, 0
      %v734 = vmul.f32 %v728, %v732
      %v735 = vmul.f32 %v730, %v733
      %v736 = vmul.f32 %v729, %v732
      %v737 = vmul.f32 %v731, %v733
      %738 = vrot.lane.b32.xlu0 %v380, 111
      %v739 = vpop.permute.xlu0 %738
      %740 = vrot.lane.b32.xlu0 %v383, 111
      %v741 = vpop.permute.xlu0 %740
      %742 = vrot.lane.b32.xlu0 %v403, 111
      %v743 = vpop.permute.xlu0 %742
      %744 = vrot.lane.b32.xlu0 %v406, 111
      %v745 = vpop.permute.xlu0 %744
      %v746 = vsel %vm727, %v739, %v743
      %v747 = vsel %vm727, %v741, %v745
      %v748 = vsel %vm727, %v743, %v739
      %v749 = vsel %vm727, %v745, %v741
      %v750 = vmul.f32 %v746, %v732
      %v751 = vmul.f32 %v748, %v733
      %v752 = vmul.f32 %v747, %v732
      %v753 = vmul.f32 %v749, %v733
      %754 = vst [vmem:[#allocation2 + $0x200] sm:$0xff] %v734
      %755 = vst [vmem:[#allocation2 + $0x208] sm:$0xff] %v735
      %756 = vst [vmem:[#allocation2 + $0x210] sm:$0xff] %v736
      %757 = vst [vmem:[#allocation2 + $0x218] sm:$0xff] %v737
      %758 = vst [vmem:[#allocation2 + $0x220] sm:$0xff] %v750
      %759 = vst [vmem:[#allocation2 + $0x228] sm:$0xff] %v751
      %760 = vst [vmem:[#allocation2 + $0x230] sm:$0xff] %v752
      %761 = vst [vmem:[#allocation2 + $0x238] sm:$0xff] %v753
      %v762 = vld [vmem:[%s4] sm:$0xff]
      %v763 = vld [vmem:[%s4 + $0x8] sm:$0xff]
      %v764 = vld [vmem:[%s4 + $0x10] sm:$0xff]
      %v765 = vld [vmem:[%s4 + $0x18] sm:$0xff]
      %v766 = vld [vmem:[%s4 + $0x20] sm:$0xff]
      %v767 = vld [vmem:[%s4 + $0x28] sm:$0xff]
      %v768 = vld [vmem:[%s4 + $0x30] sm:$0x1]
      %v769 = vld [vmem:[%s4 + $0x38] sm:$0x1]
      %v770 = vld [vmem:[%s4 + $0x40] sm:$0x1]
      %v771 = vld [vmem:[#allocation2] sm:$0xff]
      %v772 = vld [vmem:[#allocation2 + $0x8] sm:$0xff]
      %v773 = vld [vmem:[#allocation2 + $0x10] sm:$0xff]
      %v774 = vld [vmem:[#allocation2 + $0x18] sm:$0xff]
      %v775 = vld [vmem:[#allocation2 + $0x20] sm:$0xff]
      %v776 = vld [vmem:[#allocation2 + $0x28] sm:$0xff]
      %v777 = vld [vmem:[#allocation2 + $0x30] sm:$0xff]
      %v778 = vld [vmem:[#allocation2 + $0x38] sm:$0xff]
      %v779 = vld [vmem:[#allocation2 + $0x40] sm:$0xff]
      %v780 = vld [vmem:[#allocation2 + $0x48] sm:$0xff]
      %v781 = vld [vmem:[#allocation2 + $0x50] sm:$0xff]
      %v782 = vld [vmem:[#allocation2 + $0x58] sm:$0xff]
      %v783 = vld [vmem:[#allocation2 + $0x60] sm:$0xff]
      %v784 = vld [vmem:[#allocation2 + $0x68] sm:$0xff]
      %v785 = vld [vmem:[#allocation2 + $0x70] sm:$0xff]
      %v786 = vld [vmem:[#allocation2 + $0x78] sm:$0xff]
      %v787 = vld [vmem:[#allocation2 + $0x80] sm:$0xff]
      %v788 = vld [vmem:[#allocation2 + $0x88] sm:$0xff]
      %v789 = vld [vmem:[#allocation2 + $0x90] sm:$0xff]
      %v790 = vld [vmem:[#allocation2 + $0x98] sm:$0xff]
      %v791 = vld [vmem:[#allocation2 + $0xa0] sm:$0xff]
      %v792 = vld [vmem:[#allocation2 + $0xa8] sm:$0xff]
      %v793 = vld [vmem:[#allocation2 + $0xb0] sm:$0xff]
      %v794 = vld [vmem:[#allocation2 + $0xb8] sm:$0xff]
      %v795 = vld [vmem:[#allocation2 + $0xc0] sm:$0xff]
      %v796 = vld [vmem:[#allocation2 + $0xc8] sm:$0xff]
      %v797 = vld [vmem:[#allocation2 + $0xd0] sm:$0xff]
      %v798 = vld [vmem:[#allocation2 + $0xd8] sm:$0xff]
      %v799 = vld [vmem:[#allocation2 + $0xe0] sm:$0xff]
      %v800 = vld [vmem:[#allocation2 + $0xe8] sm:$0xff]
      %v801 = vld [vmem:[#allocation2 + $0xf0] sm:$0xff]
      %v802 = vld [vmem:[#allocation2 + $0xf8] sm:$0xff]
      %v803 = vld [vmem:[#allocation2 + $0x100] sm:$0xff]
      %v804 = vld [vmem:[#allocation2 + $0x108] sm:$0xff]
      %v805 = vld [vmem:[#allocation2 + $0x110] sm:$0xff]
      %v806 = vld [vmem:[#allocation2 + $0x118] sm:$0xff]
      %v807 = vld [vmem:[#allocation2 + $0x120] sm:$0xff]
      %v808 = vld [vmem:[#allocation2 + $0x128] sm:$0xff]
      %v809 = vld [vmem:[#allocation2 + $0x130] sm:$0xff]
      %v810 = vld [vmem:[#allocation2 + $0x138] sm:$0xff]
      %v811 = vld [vmem:[#allocation2 + $0x140] sm:$0xff]
      %v812 = vld [vmem:[#allocation2 + $0x148] sm:$0xff]
      %v813 = vld [vmem:[#allocation2 + $0x150] sm:$0xff]
      %v814 = vld [vmem:[#allocation2 + $0x158] sm:$0xff]
      %v815 = vld [vmem:[#allocation2 + $0x160] sm:$0xff]
      %v816 = vld [vmem:[#allocation2 + $0x168] sm:$0xff]
      %v817 = vld [vmem:[#allocation2 + $0x170] sm:$0xff]
      %v818 = vld [vmem:[#allocation2 + $0x178] sm:$0xff]
      %v819 = vld [vmem:[#allocation2 + $0x180] sm:$0xff]
      %v820 = vld [vmem:[#allocation2 + $0x188] sm:$0xff]
      %v821 = vld [vmem:[#allocation2 + $0x190] sm:$0xff]
      %v822 = vld [vmem:[#allocation2 + $0x198] sm:$0xff]
      %v823 = vld [vmem:[#allocation2 + $0x1a0] sm:$0xff]
      %v824 = vld [vmem:[#allocation2 + $0x1a8] sm:$0xff]
      %v825 = vld [vmem:[#allocation2 + $0x1b0] sm:$0xff]
      %v826 = vld [vmem:[#allocation2 + $0x1b8] sm:$0xff]
      %v827 = vld [vmem:[#allocation2 + $0x1c0] sm:$0xff]
      %v828 = vld [vmem:[#allocation2 + $0x1c8] sm:$0xff]
      %v829 = vld [vmem:[#allocation2 + $0x1d0] sm:$0xff]
      %v830 = vld [vmem:[#allocation2 + $0x1d8] sm:$0xff]
      %v831 = vld [vmem:[#allocation2 + $0x1e0] sm:$0xff]
      %v832 = vld [vmem:[#allocation2 + $0x1e8] sm:$0xff]
      %v833 = vld [vmem:[#allocation2 + $0x1f0] sm:$0xff]
      %v834 = vld [vmem:[#allocation2 + $0x1f8] sm:$0xff]
      %v835 = vld [vmem:[#allocation2 + $0x200] sm:$0xff]
      %v836 = vld [vmem:[#allocation2 + $0x208] sm:$0xff]
      %v837 = vld [vmem:[#allocation2 + $0x210] sm:$0xff]
      %v838 = vld [vmem:[#allocation2 + $0x218] sm:$0xff]
      %v839 = vld [vmem:[#allocation2 + $0x220] sm:$0xff]
      %v840 = vld [vmem:[#allocation2 + $0x228] sm:$0xff]
      %v841 = vld [vmem:[#allocation2 + $0x230] sm:$0xff]
      %v842 = vld [vmem:[#allocation2 + $0x238] sm:$0xff]
      %844 = vset.pattern.permute.xlu0 0
      %845 = vperm.xlu0 %844, %v334
      %v846 = vpop.permute.xlu0 %845
      %849 = vset.pattern.permute.xlu0 0
      %850 = vperm.xlu0 %849, %v335
      %v851 = vpop.permute.xlu0 %850
      %854 = vset.pattern.permute.xlu0 0
      %855 = vperm.xlu0 %854, %v336
      %v856 = vpop.permute.xlu0 %855
      %vm858 = vcmask 261120
      %v860 = vsel %vm858, %v764, 0
      %v863 = vsel %vm858, %v767, 0
      %v866 = vsel %vm858, %v770, 0
      %868 = vmatpush.msra.mxu0 %v801
      %869 = vmatpush.msra.mxu0 %v799
      %870 = vmatpush.msra.mxu0 %v797
      %871 = vmatpush.msra.mxu0 %v795
      %872 = vmatpush.msra.mxu0 %v793
      %873 = vmatpush.msra.mxu0 %v791
      %874 = vmatpush.msra.mxu0 %v789
      %875 = vmatpush.msra.mxu0 %v787
      %876 = vmatpush.msra.mxu0 %v785
      %877 = vmatpush.msra.mxu0 %v783
      %878 = vmatpush.msra.mxu0 %v781
      %879 = vmatpush.msra.mxu0 %v779
      %880 = vmatpush.msra.mxu0 %v777
      %881 = vmatpush.msra.mxu0 %v775
      %882 = vmatpush.msra.mxu0 %v773
      %883 = vmatpush.msra.mxu0 %v771
      %884 = vmatmul.f32.gmra.mxu0 %v762
      %v885 = vpop.f32.mrf.mxu0
      %v886 = vadd.f32 %v846, %v885
      %887 = vmatmul.f32.gmra.mxu0 %v765
      %v888 = vpop.f32.mrf.mxu0
      %v889 = vadd.f32 %v851, %v888
      %890 = vmatmul.f32.gmra.mxu0 %v768
      %v891 = vpop.f32.mrf.mxu0
      %v892 = vadd.f32 %v856, %v891
      %893 = vdwg.mxu0
      %894 = vmatpush.msra.mxu0 %v833
      %895 = vmatpush.msra.mxu0 %v831
      %896 = vmatpush.msra.mxu0 %v829
      %897 = vmatpush.msra.mxu0 %v827
      %898 = vmatpush.msra.mxu0 %v825
      %899 = vmatpush.msra.mxu0 %v823
      %900 = vmatpush.msra.mxu0 %v821
      %901 = vmatpush.msra.mxu0 %v819
      %902 = vmatpush.msra.mxu0 %v817
      %903 = vmatpush.msra.mxu0 %v815
      %904 = vmatpush.msra.mxu0 %v813
      %905 = vmatpush.msra.mxu0 %v811
      %906 = vmatpush.msra.mxu0 %v809
      %907 = vmatpush.msra.mxu0 %v807
      %908 = vmatpush.msra.mxu0 %v805
      %909 = vmatpush.msra.mxu0 %v803
      %910 = vmatmul.f32.gmra.mxu0 %v763
      %v911 = vpop.f32.mrf.mxu0
      %v912 = vadd.f32 %v886, %v911
      %913 = vmatmul.f32.gmra.mxu0 %v766
      %v914 = vpop.f32.mrf.mxu0
      %v915 = vadd.f32 %v889, %v914
      %916 = vmatmul.f32.gmra.mxu0 %v769
      %v917 = vpop.f32.mrf.mxu0
      %v918 = vadd.f32 %v892, %v917
      %919 = vdwg.mxu0
      %920 = vmatpush.msra.mxu0 0.0
      %921 = vmatpush.msra.mxu0 0.0
      %922 = vmatpush.msra.mxu0 0.0
      %923 = vmatpush.msra.mxu0 0.0
      %924 = vmatpush.msra.mxu0 0.0
      %925 = vmatpush.msra.mxu0 0.0
      %926 = vmatpush.msra.mxu0 0.0
      %927 = vmatpush.msra.mxu0 0.0
      %928 = vmatpush.msra.mxu0 0.0
      %929 = vmatpush.msra.mxu0 0.0
      %930 = vmatpush.msra.mxu0 0.0
      %931 = vmatpush.msra.mxu0 0.0
      %932 = vmatpush.msra.mxu0 %v841
      %933 = vmatpush.msra.mxu0 %v839
      %934 = vmatpush.msra.mxu0 %v837
      %935 = vmatpush.msra.mxu0 %v835
      %936 = vmatmul.f32.gmra.mxu0 %v860
      %v937 = vpop.f32.mrf.mxu0
      %v938 = vadd.f32 %v912, %v937
      %939 = vmatmul.f32.gmra.mxu0 %v863
      %v940 = vpop.f32.mrf.mxu0
      %v941 = vadd.f32 %v915, %v940
      %942 = vmatmul.f32.gmra.mxu0 %v866
      %v943 = vpop.f32.mrf.mxu0
      %v944 = vadd.f32 %v918, %v943
      %945 = vdwg.mxu0
      %946 = vmatpush.msra.mxu0 %v802
      %947 = vmatpush.msra.mxu0 %v800
      %948 = vmatpush.msra.mxu0 %v798
      %949 = vmatpush.msra.mxu0 %v796
      %950 = vmatpush.msra.mxu0 %v794
      %951 = vmatpush.msra.mxu0 %v792
      %952 = vmatpush.msra.mxu0 %v790
      %953 = vmatpush.msra.mxu0 %v788
      %954 = vmatpush.msra.mxu0 %v786
      %955 = vmatpush.msra.mxu0 %v784
      %956 = vmatpush.msra.mxu0 %v782
      %957 = vmatpush.msra.mxu0 %v780
      %958 = vmatpush.msra.mxu0 %v778
      %959 = vmatpush.msra.mxu0 %v776
      %960 = vmatpush.msra.mxu0 %v774
      %961 = vmatpush.msra.mxu0 %v772
      %962 = vmatmul.f32.gmra.mxu0 %v762
      %v963 = vpop.f32.mrf.mxu0
      %v964 = vadd.f32 %v846, %v963
      %965 = vmatmul.f32.gmra.mxu0 %v765
      %v966 = vpop.f32.mrf.mxu0
      %v967 = vadd.f32 %v851, %v966
      %968 = vmatmul.f32.gmra.mxu0 %v768
      %v969 = vpop.f32.mrf.mxu0
      %v970 = vadd.f32 %v856, %v969
      %971 = vdwg.mxu0
      %972 = vmatpush.msra.mxu0 %v834
      %973 = vmatpush.msra.mxu0 %v832
      %974 = vmatpush.msra.mxu0 %v830
      %975 = vmatpush.msra.mxu0 %v828
      %976 = vmatpush.msra.mxu0 %v826
      %977 = vmatpush.msra.mxu0 %v824
      %978 = vmatpush.msra.mxu0 %v822
      %979 = vmatpush.msra.mxu0 %v820
      %980 = vmatpush.msra.mxu0 %v818
      %981 = vmatpush.msra.mxu0 %v816
      %982 = vmatpush.msra.mxu0 %v814
      %983 = vmatpush.msra.mxu0 %v812
      %984 = vmatpush.msra.mxu0 %v810
      %985 = vmatpush.msra.mxu0 %v808
      %986 = vmatpush.msra.mxu0 %v806
      %987 = vmatpush.msra.mxu0 %v804
      %988 = vmatmul.f32.gmra.mxu0 %v763
      %v989 = vpop.f32.mrf.mxu0
      %v990 = vadd.f32 %v964, %v989
      %991 = vmatmul.f32.gmra.mxu0 %v766
      %v992 = vpop.f32.mrf.mxu0
      %v993 = vadd.f32 %v967, %v992
      %994 = vmatmul.f32.gmra.mxu0 %v769
      %v995 = vpop.f32.mrf.mxu0
      %v996 = vadd.f32 %v970, %v995
      %997 = vdwg.mxu0
      %998 = vmatpush.msra.mxu0 0.0
      %999 = vmatpush.msra.mxu0 0.0
      %1000 = vmatpush.msra.mxu0 0.0
      %1001 = vmatpush.msra.mxu0 0.0
      %1002 = vmatpush.msra.mxu0 0.0
      %1003 = vmatpush.msra.mxu0 0.0
      %1004 = vmatpush.msra.mxu0 0.0
      %1005 = vmatpush.msra.mxu0 0.0
      %1006 = vmatpush.msra.mxu0 0.0
      %1007 = vmatpush.msra.mxu0 0.0
      %1008 = vmatpush.msra.mxu0 0.0
      %1009 = vmatpush.msra.mxu0 0.0
      %1010 = vmatpush.msra.mxu0 %v842
      %1011 = vmatpush.msra.mxu0 %v840
      %1012 = vmatpush.msra.mxu0 %v838
      %1013 = vmatpush.msra.mxu0 %v836
      %1014 = vmatmul.f32.gmra.mxu0 %v860
      %v1015 = vpop.f32.mrf.mxu0
      %v1016 = vadd.f32 %v990, %v1015
      %1017 = vmatmul.f32.gmra.mxu0 %v863
      %v1018 = vpop.f32.mrf.mxu0
      %v1019 = vadd.f32 %v993, %v1018
      %1020 = vmatmul.f32.gmra.mxu0 %v866
      %v1021 = vpop.f32.mrf.mxu0
      %v1022 = vadd.f32 %v996, %v1021
      %1023 = vdwg.mxu0
      %v1024 = vxor.u32 %v944, 2147483648
      %v1025 = vxor.u32 %v1022, 2147483648
      %v1026 = vmul.f32 %v1024, 1.442695
      %v1027 = vpow.pop %v1026
      %v1028 = vmul.f32 %v1025, 1.442695
      %v1029 = vpow.pop %v1028
      %v1030 = vadd.f32 %v1027, 1.0
      %v1031 = vadd.f32 %v1029, 1.0
      %v1032 = vrcp.pop %v1030
      %v1033 = vmul.f32 %v1030, %v1032
      %v1034 = vsub.f32 1.0, %v1033
      %v1035 = vmul.f32 %v1032, %v1034
      %v1036 = vadd.f32 %v1032, %v1035
      %vm1037 = vweird.f32 %v1030
      %vm1038 = vweird.f32 %v1032
      %vm1039 = vmor %vm1037, %vm1038
      %v1040 = vsel %vm1039, %v1032, %v1036
      %v1041 = vand.u32 2147483647, %v1030
      %vm1042 = vcmp.eq.f32.partialorder %v1041, 8.507059e+37
      %v1043 = vand.u32 %v1030, 2147483648
      %v1044 = vor.u32 1.1754944e-38, %v1043
      %v1045 = vsel %vm1042, %v1044, %v1040
      %v1046 = vmul.f32 1.0, %v1045
      %v1047 = vrcp.pop %v1031
      %v1048 = vmul.f32 %v1031, %v1047
      %v1049 = vsub.f32 1.0, %v1048
      %v1050 = vmul.f32 %v1047, %v1049
      %v1051 = vadd.f32 %v1047, %v1050
      %vm1052 = vweird.f32 %v1031
      %vm1053 = vweird.f32 %v1047
      %vm1054 = vmor %vm1052, %vm1053
      %v1055 = vsel %vm1054, %v1047, %v1051
      %v1056 = vand.u32 2147483647, %v1031
      %vm1057 = vcmp.eq.f32.partialorder %v1056, 8.507059e+37
      %v1058 = vand.u32 %v1031, 2147483648
      %v1059 = vor.u32 1.1754944e-38, %v1058
      %v1060 = vsel %vm1057, %v1059, %v1055
      %v1061 = vmul.f32 1.0, %v1060
      %v1062 = vadd.f32 %v938, %v1016
      %1063 = vadd.xlane.f32.xlu0 %v1062
      %v1064 = vpop.xlane.xlu0 %1063
      %v1065 = vadd.f32 %v941, %v1019
      %1066 = vadd.xlane.f32.xlu0 %v1065
      %v1067 = vpop.xlane.xlu0 %1066
      %v1068 = vmul.f32 %v938, %v938
      %v1069 = vmul.f32 %v1016, %v1016
      %v1070 = vmul.f32 %v941, %v941
      %v1071 = vmul.f32 %v1019, %v1019
      %v1072 = vadd.f32 %v1068, %v1069
      %1073 = vadd.xlane.f32.xlu0 %v1072
      %v1074 = vpop.xlane.xlu0 %1073
      %v1075 = vadd.f32 %v1070, %v1071
      %1076 = vadd.xlane.f32.xlu0 %v1075
      %v1077 = vpop.xlane.xlu0 %1076
      %v1078 = vld [vmem:[%s7] sm:$0xff]
      %v1079 = vld [vmem:[%s7 + $0x8] sm:$0xff]
      %vm1080 = vcmask 7168
      %v1081 = vsel %vm1080, %v1064, %v1074
      %v1082 = vsel %vm1080, %v1067, %v1077
      %vm1083 = vcmask 130048
      %v1085 = vsel %vm1083, %v1078, 0
      %v1088 = vsel %vm1083, %v1079, 0
      %1090 = vmatpush.msra.mxu0 0.0
      %1091 = vmatpush.msra.mxu0 0.0
      %1092 = vmatpush.msra.mxu0 0.0
      %1093 = vmatpush.msra.mxu0 0.0
      %1094 = vmatpush.msra.mxu0 0.0
      %1095 = vmatpush.msra.mxu0 0.0
      %1096 = vmatpush.msra.mxu0 0.0
      %1097 = vmatpush.msra.mxu0 0.0
      %1098 = vmatpush.msra.mxu0 0.0
      %1099 = vmatpush.msra.mxu0 0.0
      %1100 = vmatpush.msra.mxu0 0.0
      %1101 = vmatpush.msra.mxu0 0.0
      %1102 = vmatpush.msra.mxu0 0.0
      %1103 = vmatpush.msra.mxu0 0.0
      %1104 = vmatpush.msra.mxu0 %v1082
      %1105 = vmatpush.msra.mxu0 %v1081
      %1106 = vmatmul.f32.gmra.mxu0 %v1085
      %v1107 = vpop.f32.mrf.mxu0
      %v1108 = vadd.f32 0.0, %v1107
      %1109 = vmatmul.f32.gmra.mxu0 %v1088
      %v1110 = vpop.f32.mrf.mxu0
      %v1111 = vadd.f32 0.0, %v1110
      %1112 = vdwg.mxu0
      %v1113 = vmul.f32 %v1108, %v1108
      %v1114 = vmul.f32 %v1111, %v1111
      %1117 = vrot.lane.b32.xlu0 %v1113, 1
      %v1118 = vpop.permute.xlu0 %1117
      %1119 = vrot.lane.b32.xlu0 %v1114, 1
      %v1120 = vpop.permute.xlu0 %1119
      %v1123 = vsub.f32 %v1108, %v1118
      %v1124 = vsub.f32 %v1111, %v1120
      %v1125 = vadd.f32 %v1123, 1e-05
      %v1126 = vadd.f32 %v1124, 1e-05
      %v1127 = vrsqrt.pop %v1125
      %v1128 = vmul.f32 %v1127, %v1125
      %v1129 = vmul.f32 %v1128, %v1127
      %v1130 = vmul.f32 0.5, %v1129
      %v1131 = vsub.f32 1.5, %v1130
      %v1132 = vmul.f32 %v1127, %v1131
      %vm1133 = vweird.f32 %v1125
      %vm1134 = vweird.f32 %v1127
      %vm1135 = vmor %vm1133, %vm1134
      %v1136 = vsel %vm1135, %v1127, %v1132
      %v1137 = vrsqrt.pop %v1126
      %v1138 = vmul.f32 %v1137, %v1126
      %v1139 = vmul.f32 %v1138, %v1137
      %v1140 = vmul.f32 0.5, %v1139
      %v1141 = vsub.f32 1.5, %v1140
      %v1142 = vmul.f32 %v1137, %v1141
      %vm1143 = vweird.f32 %v1126
      %vm1144 = vweird.f32 %v1137
      %vm1145 = vmor %vm1143, %vm1144
      %v1146 = vsel %vm1145, %v1137, %v1142
      %1148 = vset.pattern.permute.xlu0 0
      %1149 = vperm.xlu0 %1148, %v1108
      %v1150 = vpop.permute.xlu0 %1149
      %1153 = vset.pattern.permute.xlu0 0
      %1154 = vperm.xlu0 %1153, %v1111
      %v1155 = vpop.permute.xlu0 %1154
      %v1157 = vsub.f32 %v938, %v1150
      %v1158 = vsub.f32 %v1016, %v1150
      %v1159 = vsub.f32 %v941, %v1155
      %v1160 = vsub.f32 %v1019, %v1155
      %1162 = vset.pattern.permute.xlu0 1
      %1163 = vperm.xlu0 %1162, %v1136
      %v1164 = vpop.permute.xlu0 %1163
      %1167 = vset.pattern.permute.xlu0 1
      %1168 = vperm.xlu0 %1167, %v1146
      %v1169 = vpop.permute.xlu0 %1168
      %v1171 = vmul.f32 %v1157, %v1164
      %v1172 = vmul.f32 %v1158, %v1164
      %v1173 = vmul.f32 %v1159, %v1169
      %v1174 = vmul.f32 %v1160, %v1169
      %1175 = vset.pattern.permute.xlu0 1
      %1176 = vperm.xlu0 %1175, %v334
      %v1177 = vpop.permute.xlu0 %1176
      %1179 = vset.pattern.permute.xlu0 1
      %1180 = vperm.xlu0 %1179, %v335
      %v1181 = vpop.permute.xlu0 %1180
      %v1183 = vmul.f32 %v1171, %v1177
      %v1184 = vmul.f32 %v1172, %v1177
      %v1185 = vmul.f32 %v1173, %v1181
      %v1186 = vmul.f32 %v1174, %v1181
      %1187 = vset.pattern.permute.xlu0 2
      %1188 = vperm.xlu0 %1187, %v334
      %v1189 = vpop.permute.xlu0 %1188
      %1191 = vset.pattern.permute.xlu0 2
      %1192 = vperm.xlu0 %1191, %v335
      %v1193 = vpop.permute.xlu0 %1192
      %v1195 = vadd.f32 %v1183, %v1189
      %v1196 = vadd.f32 %v1184, %v1189
      %v1197 = vadd.f32 %v1185, %v1193
      %v1198 = vadd.f32 %v1186, %v1193
      %v1199 = vmax.f32 %v1195, 0.0
      %v1200 = vmax.f32 %v1196, 0.0
      %v1201 = vmax.f32 %v1197, 0.0
      %v1202 = vmax.f32 %v1198, 0.0
      %1203 = vrot.lane.b32.xlu0 %v1199, 17
      %v1204 = vpop.permute.xlu0 %1203
      %1205 = vrot.lane.b32.xlu0 %v1201, 17
      %v1206 = vpop.permute.xlu0 %1205
      %1207 = vrot.lane.b32.xlu0 %v1200, 17
      %v1208 = vpop.permute.xlu0 %1207
      %1209 = vrot.lane.b32.xlu0 %v1202, 17
      %v1210 = vpop.permute.xlu0 %1209
      %v1211 = vsel %vm418, %v1204, %v1208
      %v1212 = vsel %vm418, %v1206, %v1210
      %v1213 = vsel %vm418, %v1208, %v1204
      %v1214 = vsel %vm418, %v1210, %v1206
      %v1215 = vmul.f32 %v1213, %v423
      %v1216 = vmul.f32 %v1211, %v424
      %v1217 = vmul.f32 %v1214, %v423
      %v1218 = vmul.f32 %v1212, %v424
      %1219 = vst [vmem:[#allocation2] sm:$0xff] %v1215
      %1220 = vst [vmem:[#allocation2 + $0x8] sm:$0xff] %v1216
      %1221 = vst [vmem:[#allocation2 + $0x10] sm:$0xff] %v1217
      %1222 = vst [vmem:[#allocation2 + $0x18] sm:$0xff] %v1218
      %1223 = vrot.lane.b32.xlu0 %v1199, 16
      %v1224 = vpop.permute.xlu0 %1223
      %1225 = vrot.lane.b32.xlu0 %v1201, 16
      %v1226 = vpop.permute.xlu0 %1225
      %1227 = vrot.lane.b32.xlu0 %v1200, 16
      %v1228 = vpop.permute.xlu0 %1227
      %1229 = vrot.lane.b32.xlu0 %v1202, 16
      %v1230 = vpop.permute.xlu0 %1229
      %v1231 = vsel %vm461, %v1224, %v1228
      %v1232 = vsel %vm461, %v1226, %v1230
      %v1233 = vsel %vm461, %v1228, %v1224
      %v1234 = vsel %vm461, %v1230, %v1226
      %v1235 = vmul.f32 %v1233, %v466
      %v1236 = vmul.f32 %v1231, %v467
      %v1237 = vmul.f32 %v1234, %v466
      %v1238 = vmul.f32 %v1232, %v467
      %1239 = vst [vmem:[#allocation2 + $0x20] sm:$0xff] %v1235
      %1240 = vst [vmem:[#allocation2 + $0x28] sm:$0xff] %v1236
      %1241 = vst [vmem:[#allocation2 + $0x30] sm:$0xff] %v1237
      %1242 = vst [vmem:[#allocation2 + $0x38] sm:$0xff] %v1238
      %1243 = vrot.lane.b32.xlu0 %v1199, 15
      %v1244 = vpop.permute.xlu0 %1243
      %1245 = vrot.lane.b32.xlu0 %v1201, 15
      %v1246 = vpop.permute.xlu0 %1245
      %1247 = vrot.lane.b32.xlu0 %v1200, 15
      %v1248 = vpop.permute.xlu0 %1247
      %1249 = vrot.lane.b32.xlu0 %v1202, 15
      %v1250 = vpop.permute.xlu0 %1249
      %v1251 = vsel %vm504, %v1244, %v1248
      %v1252 = vsel %vm504, %v1246, %v1250
      %v1253 = vsel %vm504, %v1248, %v1244
      %v1254 = vsel %vm504, %v1250, %v1246
      %v1255 = vmul.f32 %v1253, %v509
      %v1256 = vmul.f32 %v1251, %v510
      %v1257 = vmul.f32 %v1254, %v509
      %v1258 = vmul.f32 %v1252, %v510
      %1259 = vst [vmem:[#allocation2 + $0x40] sm:$0xff] %v1255
      %1260 = vst [vmem:[#allocation2 + $0x48] sm:$0xff] %v1256
      %1261 = vst [vmem:[#allocation2 + $0x50] sm:$0xff] %v1257
      %1262 = vst [vmem:[#allocation2 + $0x58] sm:$0xff] %v1258
      %1263 = vrot.lane.b32.xlu0 %v1199, 1
      %v1264 = vpop.permute.xlu0 %1263
      %1265 = vrot.lane.b32.xlu0 %v1201, 1
      %v1266 = vpop.permute.xlu0 %1265
      %1267 = vrot.lane.b32.xlu0 %v1200, 1
      %v1268 = vpop.permute.xlu0 %1267
      %1269 = vrot.lane.b32.xlu0 %v1202, 1
      %v1270 = vpop.permute.xlu0 %1269
      %v1271 = vsel %vm547, %v1264, %v1268
      %v1272 = vsel %vm547, %v1266, %v1270
      %v1273 = vsel %vm547, %v1268, %v1264
      %v1274 = vsel %vm547, %v1270, %v1266
      %v1275 = vmul.f32 %v1273, %v552
      %v1276 = vmul.f32 %v1271, %v553
      %v1277 = vmul.f32 %v1274, %v552
      %v1278 = vmul.f32 %v1272, %v553
      %1279 = vst [vmem:[#allocation2 + $0x60] sm:$0xff] %v1275
      %1280 = vst [vmem:[#allocation2 + $0x68] sm:$0xff] %v1276
      %1281 = vst [vmem:[#allocation2 + $0x70] sm:$0xff] %v1277
      %1282 = vst [vmem:[#allocation2 + $0x78] sm:$0xff] %v1278
      %1283 = vst [vmem:[#allocation2 + $0x80] sm:$0xff] %v1199
      %1284 = vst [vmem:[#allocation2 + $0x88] sm:$0xff] %v1200
      %1285 = vst [vmem:[#allocation2 + $0x90] sm:$0xff] %v1201
      %1286 = vst [vmem:[#allocation2 + $0x98] sm:$0xff] %v1202
      %1287 = vrot.lane.b32.xlu0 %v1199, 127
      %v1288 = vpop.permute.xlu0 %1287
      %1289 = vrot.lane.b32.xlu0 %v1201, 127
      %v1290 = vpop.permute.xlu0 %1289
      %1291 = vrot.lane.b32.xlu0 %v1200, 127
      %v1292 = vpop.permute.xlu0 %1291
      %1293 = vrot.lane.b32.xlu0 %v1202, 127
      %v1294 = vpop.permute.xlu0 %1293
      %v1295 = vsel %vm598, %v1288, %v1292
      %v1296 = vsel %vm598, %v1290, %v1294
      %v1297 = vsel %vm598, %v1292, %v1288
      %v1298 = vsel %vm598, %v1294, %v1290
      %v1299 = vmul.f32 %v1295, %v603
      %v1300 = vmul.f32 %v1297, %v604
      %v1301 = vmul.f32 %v1296, %v603
      %v1302 = vmul.f32 %v1298, %v604
      %1303 = vst [vmem:[#allocation2 + $0xa0] sm:$0xff] %v1299
      %1304 = vst [vmem:[#allocation2 + $0xa8] sm:$0xff] %v1300
      %1305 = vst [vmem:[#allocation2 + $0xb0] sm:$0xff] %v1301
      %1306 = vst [vmem:[#allocation2 + $0xb8] sm:$0xff] %v1302
      %1307 = vrot.lane.b32.xlu0 %v1199, 113
      %v1308 = vpop.permute.xlu0 %1307
      %1309 = vrot.lane.b32.xlu0 %v1201, 113
      %v1310 = vpop.permute.xlu0 %1309
      %1311 = vrot.lane.b32.xlu0 %v1200, 113
      %v1312 = vpop.permute.xlu0 %1311
      %1313 = vrot.lane.b32.xlu0 %v1202, 113
      %v1314 = vpop.permute.xlu0 %1313
      %v1315 = vsel %vm641, %v1308, %v1312
      %v1316 = vsel %vm641, %v1310, %v1314
      %v1317 = vsel %vm641, %v1312, %v1308
      %v1318 = vsel %vm641, %v1314, %v1310
      %v1319 = vmul.f32 %v1315, %v646
      %v1320 = vmul.f32 %v1317, %v647
      %v1321 = vmul.f32 %v1316, %v646
      %v1322 = vmul.f32 %v1318, %v647
      %1323 = vst [vmem:[#allocation2 + $0xc0] sm:$0xff] %v1319
      %1324 = vst [vmem:[#allocation2 + $0xc8] sm:$0xff] %v1320
      %1325 = vst [vmem:[#allocation2 + $0xd0] sm:$0xff] %v1321
      %1326 = vst [vmem:[#allocation2 + $0xd8] sm:$0xff] %v1322
      %1327 = vrot.lane.b32.xlu0 %v1199, 112
      %v1328 = vpop.permute.xlu0 %1327
      %1329 = vrot.lane.b32.xlu0 %v1201, 112
      %v1330 = vpop.permute.xlu0 %1329
      %1331 = vrot.lane.b32.xlu0 %v1200, 112
      %v1332 = vpop.permute.xlu0 %1331
      %1333 = vrot.lane.b32.xlu0 %v1202, 112
      %v1334 = vpop.permute.xlu0 %1333
      %v1335 = vsel %vm684, %v1328, %v1332
      %v1336 = vsel %vm684, %v1330, %v1334
      %v1337 = vsel %vm684, %v1332, %v1328
      %v1338 = vsel %vm684, %v1334, %v1330
      %v1339 = vmul.f32 %v1335, %v689
      %v1340 = vmul.f32 %v1337, %v690
      %v1341 = vmul.f32 %v1336, %v689
      %v1342 = vmul.f32 %v1338, %v690
      %1343 = vst [vmem:[#allocation2 + $0xe0] sm:$0xff] %v1339
      %1344 = vst [vmem:[#allocation2 + $0xe8] sm:$0xff] %v1340
      %1345 = vst [vmem:[#allocation2 + $0xf0] sm:$0xff] %v1341
      %1346 = vst [vmem:[#allocation2 + $0xf8] sm:$0xff] %v1342
      %1347 = vrot.lane.b32.xlu0 %v1199, 111
      %v1348 = vpop.permute.xlu0 %1347
      %1349 = vrot.lane.b32.xlu0 %v1201, 111
      %v1350 = vpop.permute.xlu0 %1349
      %1351 = vrot.lane.b32.xlu0 %v1200, 111
      %v1352 = vpop.permute.xlu0 %1351
      %1353 = vrot.lane.b32.xlu0 %v1202, 111
      %v1354 = vpop.permute.xlu0 %1353
      %v1355 = vsel %vm727, %v1348, %v1352
      %v1356 = vsel %vm727, %v1350, %v1354
      %v1357 = vsel %vm727, %v1352, %v1348
      %v1358 = vsel %vm727, %v1354, %v1350
      %v1359 = vmul.f32 %v1355, %v732
      %v1360 = vmul.f32 %v1357, %v733
      %v1361 = vmul.f32 %v1356, %v732
      %v1362 = vmul.f32 %v1358, %v733
      %1363 = vst [vmem:[#allocation2 + $0x100] sm:$0xff] %v1359
      %1364 = vst [vmem:[#allocation2 + $0x108] sm:$0xff] %v1360
      %1365 = vst [vmem:[#allocation2 + $0x110] sm:$0xff] %v1361
      %1366 = vst [vmem:[#allocation2 + $0x118] sm:$0xff] %v1362
      %v1367 = vld [vmem:[%s5] sm:$0xff]
      %v1368 = vld [vmem:[%s5 + $0x8] sm:$0xff]
      %v1369 = vld [vmem:[%s5 + $0x10] sm:$0xff]
      %v1370 = vld [vmem:[%s5 + $0x18] sm:$0xff]
      %v1371 = vld [vmem:[#allocation2] sm:$0xff]
      %v1372 = vld [vmem:[#allocation2 + $0x8] sm:$0xff]
      %v1373 = vld [vmem:[#allocation2 + $0x10] sm:$0xff]
      %v1374 = vld [vmem:[#allocation2 + $0x18] sm:$0xff]
      %v1375 = vld [vmem:[#allocation2 + $0x20] sm:$0xff]
      %v1376 = vld [vmem:[#allocation2 + $0x28] sm:$0xff]
      %v1377 = vld [vmem:[#allocation2 + $0x30] sm:$0xff]
      %v1378 = vld [vmem:[#allocation2 + $0x38] sm:$0xff]
      %v1379 = vld [vmem:[#allocation2 + $0x40] sm:$0xff]
      %v1380 = vld [vmem:[#allocation2 + $0x48] sm:$0xff]
      %v1381 = vld [vmem:[#allocation2 + $0x50] sm:$0xff]
      %v1382 = vld [vmem:[#allocation2 + $0x58] sm:$0xff]
      %v1383 = vld [vmem:[#allocation2 + $0x60] sm:$0xff]
      %v1384 = vld [vmem:[#allocation2 + $0x68] sm:$0xff]
      %v1385 = vld [vmem:[#allocation2 + $0x70] sm:$0xff]
      %v1386 = vld [vmem:[#allocation2 + $0x78] sm:$0xff]
      %v1387 = vld [vmem:[#allocation2 + $0x80] sm:$0xff]
      %v1388 = vld [vmem:[#allocation2 + $0x88] sm:$0xff]
      %v1389 = vld [vmem:[#allocation2 + $0x90] sm:$0xff]
      %v1390 = vld [vmem:[#allocation2 + $0x98] sm:$0xff]
      %v1391 = vld [vmem:[#allocation2 + $0xa0] sm:$0xff]
      %v1392 = vld [vmem:[#allocation2 + $0xa8] sm:$0xff]
      %v1393 = vld [vmem:[#allocation2 + $0xb0] sm:$0xff]
      %v1394 = vld [vmem:[#allocation2 + $0xb8] sm:$0xff]
      %v1395 = vld [vmem:[#allocation2 + $0xc0] sm:$0xff]
      %v1396 = vld [vmem:[#allocation2 + $0xc8] sm:$0xff]
      %v1397 = vld [vmem:[#allocation2 + $0xd0] sm:$0xff]
      %v1398 = vld [vmem:[#allocation2 + $0xd8] sm:$0xff]
      %v1399 = vld [vmem:[#allocation2 + $0xe0] sm:$0xff]
      %v1400 = vld [vmem:[#allocation2 + $0xe8] sm:$0xff]
      %v1401 = vld [vmem:[#allocation2 + $0xf0] sm:$0xff]
      %v1402 = vld [vmem:[#allocation2 + $0xf8] sm:$0xff]
      %v1403 = vld [vmem:[#allocation2 + $0x100] sm:$0xff]
      %v1404 = vld [vmem:[#allocation2 + $0x108] sm:$0xff]
      %v1405 = vld [vmem:[#allocation2 + $0x110] sm:$0xff]
      %v1406 = vld [vmem:[#allocation2 + $0x118] sm:$0xff]
      %1407 = vset.pattern.permute.xlu0 3
      %1408 = vperm.xlu0 %1407, %v334
      %v1409 = vpop.permute.xlu0 %1408
      %1411 = vset.pattern.permute.xlu0 3
      %1412 = vperm.xlu0 %1411, %v335
      %v1413 = vpop.permute.xlu0 %1412
      %v1416 = vsel %vm1083, %v1368, 0
      %v1419 = vsel %vm1083, %v1370, 0
      %1421 = vmatpush.msra.mxu0 %v1401
      %1422 = vmatpush.msra.mxu0 %v1399
      %1423 = vmatpush.msra.mxu0 %v1397
      %1424 = vmatpush.msra.mxu0 %v1395
      %1425 = vmatpush.msra.mxu0 %v1393
      %1426 = vmatpush.msra.mxu0 %v1391
      %1427 = vmatpush.msra.mxu0 %v1389
      %1428 = vmatpush.msra.mxu0 %v1387
      %1429 = vmatpush.msra.mxu0 %v1385
      %1430 = vmatpush.msra.mxu0 %v1383
      %1431 = vmatpush.msra.mxu0 %v1381
      %1432 = vmatpush.msra.mxu0 %v1379
      %1433 = vmatpush.msra.mxu0 %v1377
      %1434 = vmatpush.msra.mxu0 %v1375
      %1435 = vmatpush.msra.mxu0 %v1373
      %1436 = vmatpush.msra.mxu0 %v1371
      %1437 = vmatmul.f32.gmra.mxu0 %v1367
      %v1438 = vpop.f32.mrf.mxu0
      %v1439 = vadd.f32 %v1409, %v1438
      %1440 = vmatmul.f32.gmra.mxu0 %v1369
      %v1441 = vpop.f32.mrf.mxu0
      %v1442 = vadd.f32 %v1413, %v1441
      %1443 = vdwg.mxu0
      %1444 = vmatpush.msra.mxu0 0.0
      %1445 = vmatpush.msra.mxu0 0.0
      %1446 = vmatpush.msra.mxu0 0.0
      %1447 = vmatpush.msra.mxu0 0.0
      %1448 = vmatpush.msra.mxu0 0.0
      %1449 = vmatpush.msra.mxu0 0.0
      %1450 = vmatpush.msra.mxu0 0.0
      %1451 = vmatpush.msra.mxu0 0.0
      %1452 = vmatpush.msra.mxu0 0.0
      %1453 = vmatpush.msra.mxu0 0.0
      %1454 = vmatpush.msra.mxu0 0.0
      %1455 = vmatpush.msra.mxu0 0.0
      %1456 = vmatpush.msra.mxu0 0.0
      %1457 = vmatpush.msra.mxu0 0.0
      %1458 = vmatpush.msra.mxu0 %v1405
      %1459 = vmatpush.msra.mxu0 %v1403
      %1460 = vmatmul.f32.gmra.mxu0 %v1416
      %v1461 = vpop.f32.mrf.mxu0
      %v1462 = vadd.f32 %v1439, %v1461
      %1463 = vmatmul.f32.gmra.mxu0 %v1419
      %v1464 = vpop.f32.mrf.mxu0
      %v1465 = vadd.f32 %v1442, %v1464
      %1466 = vdwg.mxu0
      %1467 = vmatpush.msra.mxu0 %v1402
      %1468 = vmatpush.msra.mxu0 %v1400
      %1469 = vmatpush.msra.mxu0 %v1398
      %1470 = vmatpush.msra.mxu0 %v1396
      %1471 = vmatpush.msra.mxu0 %v1394
      %1472 = vmatpush.msra.mxu0 %v1392
      %1473 = vmatpush.msra.mxu0 %v1390
      %1474 = vmatpush.msra.mxu0 %v1388
      %1475 = vmatpush.msra.mxu0 %v1386
      %1476 = vmatpush.msra.mxu0 %v1384
      %1477 = vmatpush.msra.mxu0 %v1382
      %1478 = vmatpush.msra.mxu0 %v1380
      %1479 = vmatpush.msra.mxu0 %v1378
      %1480 = vmatpush.msra.mxu0 %v1376
      %1481 = vmatpush.msra.mxu0 %v1374
      %1482 = vmatpush.msra.mxu0 %v1372
      %1483 = vmatmul.f32.gmra.mxu0 %v1367
      %v1484 = vpop.f32.mrf.mxu0
      %v1485 = vadd.f32 %v1409, %v1484
      %1486 = vmatmul.f32.gmra.mxu0 %v1369
      %v1487 = vpop.f32.mrf.mxu0
      %v1488 = vadd.f32 %v1413, %v1487
      %1489 = vdwg.mxu0
      %1490 = vmatpush.msra.mxu0 0.0
      %1491 = vmatpush.msra.mxu0 0.0
      %1492 = vmatpush.msra.mxu0 0.0
      %1493 = vmatpush.msra.mxu0 0.0
      %1494 = vmatpush.msra.mxu0 0.0
      %1495 = vmatpush.msra.mxu0 0.0
      %1496 = vmatpush.msra.mxu0 0.0
      %1497 = vmatpush.msra.mxu0 0.0
      %1498 = vmatpush.msra.mxu0 0.0
      %1499 = vmatpush.msra.mxu0 0.0
      %1500 = vmatpush.msra.mxu0 0.0
      %1501 = vmatpush.msra.mxu0 0.0
      %1502 = vmatpush.msra.mxu0 0.0
      %1503 = vmatpush.msra.mxu0 0.0
      %1504 = vmatpush.msra.mxu0 %v1406
      %1505 = vmatpush.msra.mxu0 %v1404
      %1506 = vmatmul.f32.gmra.mxu0 %v1416
      %v1507 = vpop.f32.mrf.mxu0
      %v1508 = vadd.f32 %v1485, %v1507
      %1509 = vmatmul.f32.gmra.mxu0 %v1419
      %v1510 = vpop.f32.mrf.mxu0
      %v1511 = vadd.f32 %v1488, %v1510
      %1512 = vdwg.mxu0
      %v1513 = vperm.slane %v1046, 0
      %v1514 = vperm.slane %v1061, 0
      %v1515 = vmul.f32 %v1513, %v1462
      %v1516 = vmul.f32 %v1514, %v1508
      %v1517 = vmul.f32 %v1513, %v1465
      %v1518 = vmul.f32 %v1514, %v1511
      %v1519 = vadd.f32 %v326, %v1515
      %v1520 = vadd.f32 %v327, %v1516
      %v1521 = vadd.f32 %v328, %v1517
      %v1522 = vadd.f32 %v329, %v1518
      %1523 = vst [vmem:[%s325] sm:$0xff] %v1519
      %1524 = vst [vmem:[%s325 + $0x8] sm:$0xff] %v1520
      %1525 = vst [vmem:[%s325 + $0x10] sm:$0xff] %v1521
      %1526 = vst [vmem:[%s325 + $0x18] sm:$0xff] %v1522
      %p1527 = scmp.lt.s32.totalorder %s19, 1
      %s1528 = scalar_select %p1527, %s19, 1
      %s1529 = smul.addr %s1528, 4
      %s1530 = smul.addr %s1529, 8
      %s1531 = scalar_lea.vmem %s8, %s1530
      // Predicated region
      $region53: #{_forward.1} parent=51 // pred_check
        %p1532 = pneg %p215
      $region54: #{_forward.1} parent=51 // pred_check_branch
        %1534 = sbr.rel (%p1532) target = $region56
      $region55: #{_forward.1} parent=51 // pred_region
        _
      $region56: #{_forward.1} parent=51 // pred_fallthru
        _
    $region52: #{_forward.1} parent=5 // pred_fallthru
      _
    %p1535 = scmp.le.s32.totalorder 2, %s14
    // Predicated region
    $region57: #{_forward.1} parent=5 // pred_check
      %p1536 = pneg %p1535
    $region58: #{_forward.1} parent=5 // pred_check_branch
      %1538 = sbr.rel (%p1536) target = $region60
    $region59: #{_forward.1} parent=5 // pred_region
      %s1539 = ssub.s32 %s14, 2
      // Predicated region
      $region61: #{_forward.1} parent=59 // pred_check
        %p1540 = pneg %p221
      $region62: #{_forward.1} parent=59 // pred_check_branch
        %1542 = sbr.rel (%p1540) target = $region64
      $region63: #{_forward.1} parent=59 // pred_region
        %p1543 = scmp.lt.s32.totalorder %s20, 1
        %s1544 = scalar_select %p1543, %s20, 1
        %s1545 = smul.addr %s1544, 4
        %s1546 = smul.addr %s1545, 8
        %s1547 = scalar_lea.vmem %s8, %s1546
      $region64: #{_forward.1} parent=59 // pred_fallthru
        _
    $region60: #{_forward.1} parent=5 // pred_fallthru
      _
  $region6: #{_forward.1} parent=0 // loop_footer
    %s18 = sadd.s32 1, %s14
  $region7: #{_forward.1} parent=0 // loop_footer_branch
    %13 = sbr.rel target = $region3
  $region8: #{_forward.1} parent=0 // loop_exit
    _

</llo_original>
